<compile_context>
chip_gen: v7x
topology: tpu7x:2x2x1
jax: 0.10.0
libtpu: 0.0.40
codegen_flags: <defaults>
</compile_context>

<pallas_src>
import jax
import jax.numpy as jnp
from jax.experimental import pallas as pl
from jax.experimental.pallas import tpu as pltpu


# ----------------------------------------------------------------------------
# Kernel
# ----------------------------------------------------------------------------
def _mbm_mlp_kernel(f1_ref, f2_ref, w1a_ref, w1b_ref, b1_ref,
                    w2_ref, b2_ref, w3_ref, b3_ref, o_ref):
    wdt = w1a_ref.dtype
    # Layer 1: the concat is fused as a split matmul:
    #   relu(f1 @ W1[:d1] + f2 @ W1[d1:] + b1), f32 accumulation on the MXU.
    h1 = jnp.dot(f1_ref[...].astype(wdt), w1a_ref[...],
                 preferred_element_type=jnp.float32)
    h1 = h1 + jnp.dot(f2_ref[...].astype(wdt), w1b_ref[...],
                      preferred_element_type=jnp.float32)
    h1 = jnp.maximum(h1 + b1_ref[...].astype(jnp.float32), 0.0)

    # Layer 2: relu(h1 @ W2 + b2).  Cast to the weight dtype so bf16 weights
    # keep the native bf16 x bf16 -> f32 MXU path (no-op for f32 weights).
    h2 = jnp.dot(h1.astype(w2_ref.dtype), w2_ref[...],
                 preferred_element_type=jnp.float32)
    h2 = jnp.maximum(h2 + b2_ref[...].astype(jnp.float32), 0.0)

    # Layer 3 (no activation).
    out = jnp.dot(h2.astype(w3_ref.dtype), w3_ref[...],
                  preferred_element_type=jnp.float32)
    out = out + b3_ref[...].astype(jnp.float32)
    o_ref[...] = out.astype(o_ref.dtype)


# ----------------------------------------------------------------------------
# Helpers
# ----------------------------------------------------------------------------
def _round_up(x, m):
    return ((x + m - 1) // m) * m


def _vmem_limit_bytes():
    """Generation-aware scoped-VMEM request (None -> use compiler default)."""
    kind = ""
    try:
        kind = jax.devices()[0].device_kind.lower()
    except Exception:
        pass
    if "v7" in kind:
        # 64 MiB physical per TC: leave headroom for Mosaic scratch / spills.
        return 52 * 1024 * 1024
    if any(t in kind for t in ("v6", "trillium", "v5e", "v5 lite", "v5litepod")):
        # 128 MiB physical VMEM: use most of it for bigger batch tiles.
        return 100 * 1024 * 1024
    if "v4" in kind:
        return 96 * 1024 * 1024
    return None  # unknown chip: keep the compiler's default scoped limit


def _pick_batch_tile(B, *, requested, vmem_limit, weight_bytes, row_bytes):
    """Pick a batch tile: big enough to amortize per-step overhead, small
    enough to fit VMEM, and >= 2 grid steps so v7x megacore gets work."""
    if requested is not None:
        tb = max(1, min(int(requested), B))
    else:
        max_tile = 512 if vmem_limit >= 80 * 1024 * 1024 else 256
        budget = vmem_limit - weight_bytes - 8 * 1024 * 1024
        fit = max(8, int(budget) // max(int(row_bytes), 1))
        tb = min(B, max_tile, fit)
        if B > 16 and tb >= B:
            tb = -(-B // 2)  # split in two -> both TensorCores busy on v7x
    if tb < B and tb % 8 != 0:
        tb = min(B, ((tb + 7) // 8) * 8)  # (8, x) sublane constraint
    return int(tb)


def prepare_params(params, d1, d2, *, compute_dtype=None, lane=128):
    """Split W1 for the fused concat, pad every lane dim to a 128 multiple and
    cast weights to the compute dtype.  Do this ONCE (hoisted out of the
    per-call path); zero padding leaves the forward math exact."""
    w1, b1 = params["w1"], params["b1"]
    w2, b2 = params["w2"], params["b2"]
    w3, b3 = params["w3"], params["b3"]
    in_dim, hidden = w1.shape
    assert in_dim == d1 + d2, "w1 rows must equal d1 + d2"
    out_dim = w3.shape[1]

    d1_p, d2_p = _round_up(d1, lane), _round_up(d2, lane)
    hid_p = _round_up(hidden, lane)
    out_p = _round_up(out_dim, lane)
    wd = jnp.dtype(compute_dtype) if compute_dtype is not None else w1.dtype

    w1a = jnp.pad(w1[:d1], ((0, d1_p - d1), (0, hid_p - hidden))).astype(wd)
    w1b = jnp.pad(w1[d1:], ((0, d2_p - d2), (0, hid_p - hidden))).astype(wd)
    w2p = jnp.pad(w2, ((0, hid_p - hidden), (0, hid_p - hidden))).astype(wd)
    w3p = jnp.pad(w3, ((0, hid_p - hidden), (0, out_p - out_dim))).astype(wd)
    # Biases stay f32: they are added in the f32 epilogue inside the kernel.
    b1p = jnp.pad(b1.reshape(1, hidden), ((0, 0), (0, hid_p - hidden))).astype(jnp.float32)
    b2p = jnp.pad(b2.reshape(1, hidden), ((0, 0), (0, hid_p - hidden))).astype(jnp.float32)
    b3p = jnp.pad(b3.reshape(1, out_dim), ((0, 0), (0, out_p - out_dim))).astype(jnp.float32)

    return {
        "w1a": w1a, "w1b": w1b, "b1": b1p,
        "w2": w2p, "b2": b2p, "w3": w3p, "b3": b3p,
        "_meta": dict(d1=d1, d2=d2, d1_p=d1_p, d2_p=d2_p,
                      hidden=hidden, hid_p=hid_p,
                      out_dim=out_dim, out_p=out_p,
                      compute_dtype=(None if compute_dtype is None
                                     else jnp.dtype(compute_dtype))),
    }


# Capability cache: does this JAX/Mosaic support single-buffered weight specs?
_SINGLE_BUFFER_WEIGHTS_OK = None


# ----------------------------------------------------------------------------
# Wrapper
# ----------------------------------------------------------------------------
def mbm_forward(feat1, feat2, params, *, batch_tile=None, compute_dtype=None,
                out_dtype=None, slice_output=True):
    """Pallas implementation of ManifoldBridgingModule.forward.

    feat1: (B, d1), feat2: (B, d2); in_dim = d1 + d2.
    params: either the raw dict {w1,b1,w2,b2,w3,b3} (w* stored as (in, out) so
    the kernel computes x @ W) or the output of prepare_params().
    Returns {"feat_2d": (B, out_dim)} matching the PyTorch module.
    """
    global _SINGLE_BUFFER_WEIGHTS_OK

    B, d1 = feat1.shape
    _, d2 = feat2.shape
    if "w1a" not in params:  # raw params: prepare on the fly (prefer hoisting)
        params = prepare_params(params, d1, d2, compute_dtype=compute_dtype)
    meta = params["_meta"]
    assert meta["d1"] == d1 and meta["d2"] == d2, "feature dims mismatch params"

    w1a, w1b, b1 = params["w1a"], params["w1b"], params["b1"]
    w2, b2 = params["w2"], params["b2"]
    w3, b3 = params["w3"], params["b3"]
    d1_p, d2_p = meta["d1_p"], meta["d2_p"]
    hid_p, out_dim, out_p = meta["hid_p"], meta["out_dim"], meta["out_p"]

    if out_dtype is None:
        out_dtype = feat1.dtype  # result dtype follows the (original) inputs
    out_dtype = jnp.dtype(out_dtype)

    # Cast features to the compute dtype (explicit, so the MXU path is the
    # intended one) and pad feature dims to lane multiples so layer-1 loads
    # and matmuls are unmasked, full-lane operations.
    cdt = meta["compute_dtype"]
    if cdt is not None and feat1.dtype != cdt:
        feat1 = feat1.astype(cdt)
    if cdt is not None and feat2.dtype != cdt:
        feat2 = feat2.astype(cdt)
    if d1_p != d1:
        feat1 = jnp.pad(feat1, ((0, 0), (0, d1_p - d1)))
    if d2_p != d2:
        feat2 = jnp.pad(feat2, ((0, 0), (0, d2_p - d2)))

    # Generation-aware VMEM budget and batch tile.
    vmem_limit = _vmem_limit_bytes()
    assumed_limit = vmem_limit if vmem_limit is not None else 64 * 1024 * 1024
    weight_bytes = sum(int(a.size) * a.dtype.itemsize
                       for a in (w1a, w1b, b1, w2, b2, w3, b3))
    in_isz = feat1.dtype.itemsize
    row_bytes = (2 * (d1_p + d2_p) * in_isz          # double-buffered inputs
                 + 2 * out_p * out_dtype.itemsize    # double-buffered output
                 + 12 * hid_p)                       # f32 h1/h2 live values
    tb = _pick_batch_tile(B, requested=batch_tile, vmem_limit=assumed_limit,
                          weight_bytes=2 * weight_bytes, row_bytes=row_bytes)
    grid = (pl.cdiv(B, tb),)

    flops = 2 * B * ((d1_p + d2_p) * hid_p + hid_p * hid_p + hid_p * out_p)
    bytes_accessed = (int(feat1.size) * feat1.dtype.itemsize
                      + int(feat2.size) * feat2.dtype.itemsize
                      + weight_bytes
                      + B * out_p * out_dtype.itemsize)
    cost = pl.CostEstimate(flops=int(flops), transcendentals=0,
                           bytes_accessed=int(bytes_accessed))

    cp_kwargs = dict(dimension_semantics=("parallel",))
    if vmem_limit is not None:
        cp_kwargs["vmem_limit_bytes"] = int(vmem_limit)
    compiler_params = pltpu.CompilerParams(**cp_kwargs)

    def _run(single_buffer_weights):
        def wspec(shape):
            # Weights/biases have a constant index_map -> resident across the
            # grid; single-buffering them halves their VMEM footprint.
            if single_buffer_weights:
                return pl.BlockSpec(shape, lambda i: (0, 0),
                                    pipeline_mode=pl.Buffered(1))
            return pl.BlockSpec(shape, lambda i: (0, 0))

        grid_spec = pltpu.PrefetchScalarGridSpec(
            num_scalar_prefetch=0,
            grid=grid,
            in_specs=[
                # Activations: tiled over batch, full (lane-padded) features.
                pl.BlockSpec((tb, d1_p), lambda i: (i, 0)),
                pl.BlockSpec((tb, d2_p), lambda i: (i, 0)),
                # Weights / biases: whole array, resident across grid steps.
                wspec((d1_p, hid_p)),
                wspec((d2_p, hid_p)),
                wspec((1, hid_p)),
                wspec((hid_p, hid_p)),
                wspec((1, hid_p)),
                wspec((hid_p, out_p)),
                wspec((1, out_p)),
            ],
            out_specs=pl.BlockSpec((tb, out_p), lambda i: (i, 0)),
        )
        return pl.pallas_call(
            _mbm_mlp_kernel,
            out_shape=jax.ShapeDtypeStruct((B, out_p), out_dtype),
            grid_spec=grid_spec,
            compiler_params=compiler_params,
            cost_estimate=cost,
        )(feat1, feat2, w1a, w1b, b1, w2, b2, w3, b3)

    attempts = ([True, False] if _SINGLE_BUFFER_WEIGHTS_OK is None
                else [_SINGLE_BUFFER_WEIGHTS_OK])
    out, err = None, None
    for sb in attempts:
        try:
            out = _run(sb)
            _SINGLE_BUFFER_WEIGHTS_OK = sb
            err = None
            break
        except Exception as e:  # fall back if Buffered(1) is unsupported
            err = e
    if err is not None:
        raise err

    if slice_output and out_p != out_dim:
        out = out[:, :out_dim]
    return {"feat_2d": out}


# ----------------------------------------------------------------------------
# Init + reference
# ----------------------------------------------------------------------------
def init_params(key, in_dim, hidden_dim, out_dim, dtype=jnp.float32):
    """Deterministic synthetic init (PyTorch Linear-style uniform bounds)."""
    ks = jax.random.split(key, 6)

    def lin(kw, kb, fan_in, fan_out):
        bound = 1.0 / jnp.sqrt(fan_in)
        # stored as (in, out) so the kernel computes x @ W
        w = jax.random.uniform(kw, (fan_in, fan_out), dtype, -bound, bound)
        b = jax.random.uniform(kb, (1, fan_out), dtype, -bound, bound)
        return w, b

    w1, b1 = lin(ks[0], ks[1], in_dim, hidden_dim)
    w2, b2 = lin(ks[2], ks[3], hidden_dim, hidden_dim)
    w3, b3 = lin(ks[4], ks[5], hidden_dim, out_dim)
    return {"w1": w1, "b1": b1, "w2": w2, "b2": b2, "w3": w3, "b3": b3}


def _reference(feat1, feat2, params):
    x = jnp.concatenate([feat1, feat2], axis=1)
    h = jnp.maximum(x @ params["w1"] + params["b1"], 0.0)
    h = jnp.maximum(h @ params["w2"] + params["b2"], 0.0)
    return h @ params["w3"] + params["b3"]


# ----------------------------------------------------------------------------
# Main
# ----------------------------------------------------------------------------
if __name__ == "__main__":
    key = jax.random.PRNGKey(0)

    # --- Test 1: small shapes consistent with the module (all dims unaligned,
    # exercising the 128-lane padding path). --------------------------------
    k1, k2, kp, key = jax.random.split(key, 4)
    B, d1, d2 = 8, 16, 16
    hidden_dim, out_dim = 32, 32
    feat1 = jax.random.normal(k1, (B, d1), jnp.float32)
    feat2 = jax.random.normal(k2, (B, d2), jnp.float32)
    params = init_params(kp, d1 + d2, hidden_dim, out_dim)

    out = mbm_forward(feat1, feat2, params)
    jax.block_until_ready(out["feat_2d"])
    ref = _reference(feat1, feat2, params)
    assert out["feat_2d"].shape == (B, out_dim)
    assert jnp.allclose(out["feat_2d"], ref, atol=1e-5, rtol=1e-5)

    # --- Test 2: multi-tile grid + ragged last batch tile + padded out_dim --
    k1, k2, kp, key = jax.random.split(key, 4)
    B, d1, d2 = 300, 64, 64
    hidden_dim, out_dim = 128, 96
    feat1 = jax.random.normal(k1, (B, d1), jnp.float32)
    feat2 = jax.random.normal(k2, (B, d2), jnp.float32)
    params = init_params(kp, d1 + d2, hidden_dim, out_dim)

    out = mbm_forward(feat1, feat2, params, batch_tile=128)
    jax.block_until_ready(out["feat_2d"])
    ref = _reference(feat1, feat2, params)
    assert out["feat_2d"].shape == (B, out_dim)
    assert jnp.allclose(out["feat_2d"], ref, atol=1e-4, rtol=1e-4)

    # --- Test 3: bf16 compute path (native MXU dtype), weights prepared once
    # (padding/casting hoisted), default tile -> >= 2 grid steps (megacore). --
    prepped = prepare_params(params, d1, d2, compute_dtype=jnp.bfloat16)
    out_bf16 = mbm_forward(feat1, feat2, prepped)
    jax.block_until_ready(out_bf16["feat_2d"])
    assert out_bf16["feat_2d"].shape == (B, out_dim)
    assert out_bf16["feat_2d"].dtype == feat1.dtype  # result stays f32
    assert jnp.allclose(out_bf16["feat_2d"], ref, atol=1e-1, rtol=1e-1)

    print("KERNEL_OK")
</pallas_src>

<mosaic_0001>
module attributes {stable_mosaic.version = 11 : i64} {
  func.func @_mbm_mlp_kernel(%arg0: i32, %arg1: memref<8x128xf32, #tpu.memory_space<vmem>>, %arg2: memref<8x128xf32, #tpu.memory_space<vmem>>, %arg3: memref<128x128xf32, #tpu.memory_space<vmem>>, %arg4: memref<128x128xf32, #tpu.memory_space<vmem>>, %arg5: memref<1x128xf32, #tpu.memory_space<vmem>>, %arg6: memref<128x128xf32, #tpu.memory_space<vmem>>, %arg7: memref<1x128xf32, #tpu.memory_space<vmem>>, %arg8: memref<128x128xf32, #tpu.memory_space<vmem>>, %arg9: memref<1x128xf32, #tpu.memory_space<vmem>>, %arg10: memref<8x128xf32, #tpu.memory_space<vmem>>) attributes {dimension_semantics = [#tpu.dimension_semantics<parallel>], iteration_bounds = array<i64: 1>, scalar_prefetch = 0 : i64, scratch_operands = 0 : i64, tpu.core_type = #tpu.core_type<tc>, window_params = [{transform_indices = @transform_0, window_bounds = array<i64: 8, 128>}, {transform_indices = @transform_1, window_bounds = array<i64: 8, 128>}, {pipeline_mode = #tpu.pipeline_mode<synchronous>, transform_indices = @transform_2, window_bounds = array<i64: 128, 128>}, {pipeline_mode = #tpu.pipeline_mode<synchronous>, transform_indices = @transform_3, window_bounds = array<i64: 128, 128>}, {pipeline_mode = #tpu.pipeline_mode<synchronous>, transform_indices = @transform_4, window_bounds = array<i64: 1, 128>}, {pipeline_mode = #tpu.pipeline_mode<synchronous>, transform_indices = @transform_5, window_bounds = array<i64: 128, 128>}, {pipeline_mode = #tpu.pipeline_mode<synchronous>, transform_indices = @transform_6, window_bounds = array<i64: 1, 128>}, {pipeline_mode = #tpu.pipeline_mode<synchronous>, transform_indices = @transform_7, window_bounds = array<i64: 128, 128>}, {pipeline_mode = #tpu.pipeline_mode<synchronous>, transform_indices = @transform_8, window_bounds = array<i64: 1, 128>}, {transform_indices = @transform_9, window_bounds = array<i64: 8, 128>}]} {
    %c0 = arith.constant 0 : index
    %c0_0 = arith.constant 0 : index
    %0 = vector.load %arg1[%c0, %c0_0] : memref<8x128xf32, #tpu.memory_space<vmem>>, vector<8x128xf32>
    %c0_1 = arith.constant 0 : index
    %c0_2 = arith.constant 0 : index
    %1 = vector.load %arg3[%c0_1, %c0_2] : memref<128x128xf32, #tpu.memory_space<vmem>>, vector<128x128xf32>
    %cst = arith.constant dense<0.000000e+00> : vector<8x128xf32>
    %2 = tpu.matmul %0, %1, %cst {dimension_numbers = #tpu.dot_dimension_numbers<[1], [0], [0], [1], [0, 0, 1, 1], [], []>} : vector<8x128xf32>, vector<128x128xf32>, vector<8x128xf32> -> vector<8x128xf32>
    %c0_3 = arith.constant 0 : index
    %c0_4 = arith.constant 0 : index
    %3 = vector.load %arg2[%c0_3, %c0_4] : memref<8x128xf32, #tpu.memory_space<vmem>>, vector<8x128xf32>
    %c0_5 = arith.constant 0 : index
    %c0_6 = arith.constant 0 : index
    %4 = vector.load %arg4[%c0_5, %c0_6] : memref<128x128xf32, #tpu.memory_space<vmem>>, vector<128x128xf32>
    %cst_7 = arith.constant dense<0.000000e+00> : vector<8x128xf32>
    %5 = tpu.matmul %3, %4, %cst_7 {dimension_numbers = #tpu.dot_dimension_numbers<[1], [0], [0], [1], [0, 0, 1, 1], [], []>} : vector<8x128xf32>, vector<128x128xf32>, vector<8x128xf32> -> vector<8x128xf32>
    %6 = arith.addf %2, %5 : vector<8x128xf32>
    %c0_8 = arith.constant 0 : index
    %c0_9 = arith.constant 0 : index
    %7 = vector.load %arg5[%c0_8, %c0_9] : memref<1x128xf32, #tpu.memory_space<vmem>>, vector<1x128xf32>
    %8 = vector.broadcast %7 : vector<1x128xf32> to vector<8x128xf32>
    %9 = arith.addf %6, %8 : vector<8x128xf32>
    %cst_10 = arith.constant 0.000000e+00 : f32
    %10 = vector.broadcast %cst_10 : f32 to vector<8x128xf32>
    %11 = arith.maximumf %9, %10 : vector<8x128xf32>
    %c0_11 = arith.constant 0 : index
    %c0_12 = arith.constant 0 : index
    %12 = vector.load %arg6[%c0_11, %c0_12] : memref<128x128xf32, #tpu.memory_space<vmem>>, vector<128x128xf32>
    %cst_13 = arith.constant dense<0.000000e+00> : vector<8x128xf32>
    %13 = tpu.matmul %11, %12, %cst_13 {dimension_numbers = #tpu.dot_dimension_numbers<[1], [0], [0], [1], [0, 0, 1, 1], [], []>} : vector<8x128xf32>, vector<128x128xf32>, vector<8x128xf32> -> vector<8x128xf32>
    %c0_14 = arith.constant 0 : index
    %c0_15 = arith.constant 0 : index
    %14 = vector.load %arg7[%c0_14, %c0_15] : memref<1x128xf32, #tpu.memory_space<vmem>>, vector<1x128xf32>
    %15 = vector.broadcast %14 : vector<1x128xf32> to vector<8x128xf32>
    %16 = arith.addf %13, %15 : vector<8x128xf32>
    %cst_16 = arith.constant 0.000000e+00 : f32
    %17 = vector.broadcast %cst_16 : f32 to vector<8x128xf32>
    %18 = arith.maximumf %16, %17 : vector<8x128xf32>
    %c0_17 = arith.constant 0 : index
    %c0_18 = arith.constant 0 : index
    %19 = vector.load %arg8[%c0_17, %c0_18] : memref<128x128xf32, #tpu.memory_space<vmem>>, vector<128x128xf32>
    %cst_19 = arith.constant dense<0.000000e+00> : vector<8x128xf32>
    %20 = tpu.matmul %18, %19, %cst_19 {dimension_numbers = #tpu.dot_dimension_numbers<[1], [0], [0], [1], [0, 0, 1, 1], [], []>} : vector<8x128xf32>, vector<128x128xf32>, vector<8x128xf32> -> vector<8x128xf32>
    %c0_20 = arith.constant 0 : index
    %c0_21 = arith.constant 0 : index
    %21 = vector.load %arg9[%c0_20, %c0_21] : memref<1x128xf32, #tpu.memory_space<vmem>>, vector<1x128xf32>
    %22 = vector.broadcast %21 : vector<1x128xf32> to vector<8x128xf32>
    %23 = arith.addf %20, %22 : vector<8x128xf32>
    %c0_22 = arith.constant 0 : index
    %c0_23 = arith.constant 0 : index
    %24 = vector.load %arg10[%c0_22, %c0_23] : memref<8x128xf32, #tpu.memory_space<vmem>>, vector<8x128xf32>
    tpu.vector_store %arg10[%c0_22, %c0_23], %23 {strides = array<i32>} : memref<8x128xf32, #tpu.memory_space<vmem>>, vector<8x128xf32>,
    return
  }
  func.func @transform_0(%arg0: i32) -> (i32, i32) {
    %c0_i32 = arith.constant 0 : i32
    %c0_i32_0 = arith.constant 0 : i32
    return %arg0, %c0_i32 : i32, i32
  }
  func.func @transform_1(%arg0: i32) -> (i32, i32) {
    %c0_i32 = arith.constant 0 : i32
    %c0_i32_0 = arith.constant 0 : i32
    return %arg0, %c0_i32 : i32, i32
  }
  func.func @transform_2(%arg0: i32) -> (i32, i32) {
    %c0_i32 = arith.constant 0 : i32
    %c0_i32_0 = arith.constant 0 : i32
    %c0_i32_1 = arith.constant 0 : i32
    return %c0_i32, %c0_i32_0 : i32, i32
  }
  func.func @transform_3(%arg0: i32) -> (i32, i32) {
    %c0_i32 = arith.constant 0 : i32
    %c0_i32_0 = arith.constant 0 : i32
    %c0_i32_1 = arith.constant 0 : i32
    return %c0_i32, %c0_i32_0 : i32, i32
  }
  func.func @transform_4(%arg0: i32) -> (i32, i32) {
    %c0_i32 = arith.constant 0 : i32
    %c0_i32_0 = arith.constant 0 : i32
    %c0_i32_1 = arith.constant 0 : i32
    return %c0_i32, %c0_i32_0 : i32, i32
  }
  func.func @transform_5(%arg0: i32) -> (i32, i32) {
    %c0_i32 = arith.constant 0 : i32
    %c0_i32_0 = arith.constant 0 : i32
    %c0_i32_1 = arith.constant 0 : i32
    return %c0_i32, %c0_i32_0 : i32, i32
  }
  func.func @transform_6(%arg0: i32) -> (i32, i32) {
    %c0_i32 = arith.constant 0 : i32
    %c0_i32_0 = arith.constant 0 : i32
    %c0_i32_1 = arith.constant 0 : i32
    return %c0_i32, %c0_i32_0 : i32, i32
  }
  func.func @transform_7(%arg0: i32) -> (i32, i32) {
    %c0_i32 = arith.constant 0 : i32
    %c0_i32_0 = arith.constant 0 : i32
    %c0_i32_1 = arith.constant 0 : i32
    return %c0_i32, %c0_i32_0 : i32, i32
  }
  func.func @transform_8(%arg0: i32) -> (i32, i32) {
    %c0_i32 = arith.constant 0 : i32
    %c0_i32_0 = arith.constant 0 : i32
    %c0_i32_1 = arith.constant 0 : i32
    return %c0_i32, %c0_i32_0 : i32, i32
  }
  func.func @transform_9(%arg0: i32) -> (i32, i32) {
    %c0_i32 = arith.constant 0 : i32
    %c0_i32_0 = arith.constant 0 : i32
    return %arg0, %c0_i32 : i32, i32
  }
}

module attributes {stable_mosaic.version = 11 : i64} {
  func.func @_mbm_mlp_kernel(%arg0: i32, %arg1: memref<8x128xf32, #tpu.memory_space<vmem>>, %arg2: memref<8x128xf32, #tpu.memory_space<vmem>>, %arg3: memref<128x128xf32, #tpu.memory_space<vmem>>, %arg4: memref<128x128xf32, #tpu.memory_space<vmem>>, %arg5: memref<1x128xf32, #tpu.memory_space<vmem>>, %arg6: memref<128x128xf32, #tpu.memory_space<vmem>>, %arg7: memref<1x128xf32, #tpu.memory_space<vmem>>, %arg8: memref<128x128xf32, #tpu.memory_space<vmem>>, %arg9: memref<1x128xf32, #tpu.memory_space<vmem>>, %arg10: memref<8x128xf32, #tpu.memory_space<vmem>>) attributes {dimension_semantics = [#tpu.dimension_semantics<parallel>], iteration_bounds = array<i64: 1>, scalar_prefetch = 0 : i64, scratch_operands = 0 : i64, tpu.core_type = #tpu.core_type<tc>, window_params = [{transform_indices = @transform_0, window_bounds = array<i64: 8, 128>}, {transform_indices = @transform_1, window_bounds = array<i64: 8, 128>}, {pipeline_mode = #tpu.pipeline_mode<synchronous>, transform_indices = @transform_2, window_bounds = array<i64: 128, 128>}, {pipeline_mode = #tpu.pipeline_mode<synchronous>, transform_indices = @transform_3, window_bounds = array<i64: 128, 128>}, {pipeline_mode = #tpu.pipeline_mode<synchronous>, transform_indices = @transform_4, window_bounds = array<i64: 1, 128>}, {pipeline_mode = #tpu.pipeline_mode<synchronous>, transform_indices = @transform_5, window_bounds = array<i64: 128, 128>}, {pipeline_mode = #tpu.pipeline_mode<synchronous>, transform_indices = @transform_6, window_bounds = array<i64: 1, 128>}, {pipeline_mode = #tpu.pipeline_mode<synchronous>, transform_indices = @transform_7, window_bounds = array<i64: 128, 128>}, {pipeline_mode = #tpu.pipeline_mode<synchronous>, transform_indices = @transform_8, window_bounds = array<i64: 1, 128>}, {transform_indices = @transform_9, window_bounds = array<i64: 8, 128>}]} {
    %c0 = arith.constant 0 : index
    %c0_0 = arith.constant 0 : index
    %0 = vector.load %arg1[%c0, %c0_0] : memref<8x128xf32, #tpu.memory_space<vmem>>, vector<8x128xf32>
    %c0_1 = arith.constant 0 : index
    %c0_2 = arith.constant 0 : index
    %1 = vector.load %arg3[%c0_1, %c0_2] : memref<128x128xf32, #tpu.memory_space<vmem>>, vector<128x128xf32>
    %cst = arith.constant dense<0.000000e+00> : vector<8x128xf32>
    %2 = tpu.matmul %0, %1, %cst {dimension_numbers = #tpu.dot_dimension_numbers<[1], [0], [0], [1], [0, 0, 1, 1], [], []>} : vector<8x128xf32>, vector<128x128xf32>, vector<8x128xf32> -> vector<8x128xf32>
    %c0_3 = arith.constant 0 : index
    %c0_4 = arith.constant 0 : index
    %3 = vector.load %arg2[%c0_3, %c0_4] : memref<8x128xf32, #tpu.memory_space<vmem>>, vector<8x128xf32>
    %c0_5 = arith.constant 0 : index
    %c0_6 = arith.constant 0 : index
    %4 = vector.load %arg4[%c0_5, %c0_6] : memref<128x128xf32, #tpu.memory_space<vmem>>, vector<128x128xf32>
    %cst_7 = arith.constant dense<0.000000e+00> : vector<8x128xf32>
    %5 = tpu.matmul %3, %4, %cst_7 {dimension_numbers = #tpu.dot_dimension_numbers<[1], [0], [0], [1], [0, 0, 1, 1], [], []>} : vector<8x128xf32>, vector<128x128xf32>, vector<8x128xf32> -> vector<8x128xf32>
    %6 = arith.addf %2, %5 : vector<8x128xf32>
    %c0_8 = arith.constant 0 : index
    %c0_9 = arith.constant 0 : index
    %7 = vector.load %arg5[%c0_8, %c0_9] : memref<1x128xf32, #tpu.memory_space<vmem>>, vector<1x128xf32>
    %8 = vector.broadcast %7 : vector<1x128xf32> to vector<8x128xf32>
    %9 = arith.addf %6, %8 : vector<8x128xf32>
    %cst_10 = arith.constant 0.000000e+00 : f32
    %10 = vector.broadcast %cst_10 : f32 to vector<8x128xf32>
    %11 = arith.maximumf %9, %10 : vector<8x128xf32>
    %c0_11 = arith.constant 0 : index
    %c0_12 = arith.constant 0 : index
    %12 = vector.load %arg6[%c0_11, %c0_12] : memref<128x128xf32, #tpu.memory_space<vmem>>, vector<128x128xf32>
    %cst_13 = arith.constant dense<0.000000e+00> : vector<8x128xf32>
    %13 = tpu.matmul %11, %12, %cst_13 {dimension_numbers = #tpu.dot_dimension_numbers<[1], [0], [0], [1], [0, 0, 1, 1], [], []>} : vector<8x128xf32>, vector<128x128xf32>, vector<8x128xf32> -> vector<8x128xf32>
    %c0_14 = arith.constant 0 : index
    %c0_15 = arith.constant 0 : index
    %14 = vector.load %arg7[%c0_14, %c0_15] : memref<1x128xf32, #tpu.memory_space<vmem>>, vector<1x128xf32>
    %15 = vector.broadcast %14 : vector<1x128xf32> to vector<8x128xf32>
    %16 = arith.addf %13, %15 : vector<8x128xf32>
    %cst_16 = arith.constant 0.000000e+00 : f32
    %17 = vector.broadcast %cst_16 : f32 to vector<8x128xf32>
    %18 = arith.maximumf %16, %17 : vector<8x128xf32>
    %c0_17 = arith.constant 0 : index
    %c0_18 = arith.constant 0 : index
    %19 = vector.load %arg8[%c0_17, %c0_18] : memref<128x128xf32, #tpu.memory_space<vmem>>, vector<128x128xf32>
    %cst_19 = arith.constant dense<0.000000e+00> : vector<8x128xf32>
    %20 = tpu.matmul %18, %19, %cst_19 {dimension_numbers = #tpu.dot_dimension_numbers<[1], [0], [0], [1], [0, 0, 1, 1], [], []>} : vector<8x128xf32>, vector<128x128xf32>, vector<8x128xf32> -> vector<8x128xf32>
    %c0_20 = arith.constant 0 : index
    %c0_21 = arith.constant 0 : index
    %21 = vector.load %arg9[%c0_20, %c0_21] : memref<1x128xf32, #tpu.memory_space<vmem>>, vector<1x128xf32>
    %22 = vector.broadcast %21 : vector<1x128xf32> to vector<8x128xf32>
    %23 = arith.addf %20, %22 : vector<8x128xf32>
    %c0_22 = arith.constant 0 : index
    %c0_23 = arith.constant 0 : index
    %24 = vector.load %arg10[%c0_22, %c0_23] : memref<8x128xf32, #tpu.memory_space<vmem>>, vector<8x128xf32>
    tpu.vector_store %arg10[%c0_22, %c0_23], %23 {strides = array<i32>} : memref<8x128xf32, #tpu.memory_space<vmem>>, vector<8x128xf32>,
    return
  }
  func.func @transform_0(%arg0: i32) -> (i32, i32) {
    %c0_i32 = arith.constant 0 : i32
    %c0_i32_0 = arith.constant 0 : i32
    return %arg0, %c0_i32 : i32, i32
  }
  func.func @transform_1(%arg0: i32) -> (i32, i32) {
    %c0_i32 = arith.constant 0 : i32
    %c0_i32_0 = arith.constant 0 : i32
    return %arg0, %c0_i32 : i32, i32
  }
  func.func @transform_2(%arg0: i32) -> (i32, i32) {
    %c0_i32 = arith.constant 0 : i32
    %c0_i32_0 = arith.constant 0 : i32
    %c0_i32_1 = arith.constant 0 : i32
    return %c0_i32, %c0_i32_0 : i32, i32
  }
  func.func @transform_3(%arg0: i32) -> (i32, i32) {
    %c0_i32 = arith.constant 0 : i32
    %c0_i32_0 = arith.constant 0 : i32
    %c0_i32_1 = arith.constant 0 : i32
    return %c0_i32, %c0_i32_0 : i32, i32
  }
  func.func @transform_4(%arg0: i32) -> (i32, i32) {
    %c0_i32 = arith.constant 0 : i32
    %c0_i32_0 = arith.constant 0 : i32
    %c0_i32_1 = arith.constant 0 : i32
    return %c0_i32, %c0_i32_0 : i32, i32
  }
  func.func @transform_5(%arg0: i32) -> (i32, i32) {
    %c0_i32 = arith.constant 0 : i32
    %c0_i32_0 = arith.constant 0 : i32
    %c0_i32_1 = arith.constant 0 : i32
    return %c0_i32, %c0_i32_0 : i32, i32
  }
  func.func @transform_6(%arg0: i32) -> (i32, i32) {
    %c0_i32 = arith.constant 0 : i32
    %c0_i32_0 = arith.constant 0 : i32
    %c0_i32_1 = arith.constant 0 : i32
    return %c0_i32, %c0_i32_0 : i32, i32
  }
  func.func @transform_7(%arg0: i32) -> (i32, i32) {
    %c0_i32 = arith.constant 0 : i32
    %c0_i32_0 = arith.constant 0 : i32
    %c0_i32_1 = arith.constant 0 : i32
    return %c0_i32, %c0_i32_0 : i32, i32
  }
  func.func @transform_8(%arg0: i32) -> (i32, i32) {
    %c0_i32 = arith.constant 0 : i32
    %c0_i32_0 = arith.constant 0 : i32
    %c0_i32_1 = arith.constant 0 : i32
    return %c0_i32, %c0_i32_0 : i32, i32
  }
  func.func @transform_9(%arg0: i32) -> (i32, i32) {
    %c0_i32 = arith.constant 0 : i32
    %c0_i32_0 = arith.constant 0 : i32
    return %arg0, %c0_i32 : i32, i32
  }
}

</mosaic_0001>

<llo_original>
// kernel: tpu_custom_call.1
$region0: #{tpu_custom_call.1}
  #allocation0 [shape = 'u32[]', space=smem, size = 0x4, offset = 0x4, fixed_abs, tag = 'smem constant byte address 0x4 - core index']
  #allocation1 [shape = 'u32[144,128]{1,0:T(1,128)}', space=vmem, size = 0x12000, scoped, tag = 'internal scratch']
  %s0 = inlined_call_operand.hbm [shape: f32[8,128], index: 0, kind: input, shape index: {}]
  %s1 = inlined_call_operand.hbm [shape: f32[8,128], index: 1, kind: input, shape index: {}]
  %s2 = inlined_call_operand.hbm [shape: f32[128,128], index: 2, kind: input, shape index: {}]
  %s3 = inlined_call_operand.hbm [shape: f32[128,128], index: 3, kind: input, shape index: {}]
  %s4 = inlined_call_operand.vmem [shape: f32[1,128], index: 4, kind: input, shape index: {}]
  %s5 = inlined_call_operand.hbm [shape: f32[128,128], index: 5, kind: input, shape index: {}]
  %s6 = inlined_call_operand.vmem [shape: f32[1,128], index: 6, kind: input, shape index: {}]
  %s7 = inlined_call_operand.hbm [shape: f32[128,128], index: 7, kind: input, shape index: {}]
  %s8 = inlined_call_operand.vmem [shape: f32[1,128], index: 8, kind: input, shape index: {}]
  %s9 = inlined_call_operand.hbm [shape: f32[8,128], index: 9, kind: output, shape index: {}]
  %s10 = sld [smem:[#allocation0]]
  $region70: #{tpu_custom_call.1} parent=0
    _
  %s12 = ssub.s32 1, %s10
  %s13 = scalar_select 0, %s12, %s10
  $region1: #{tpu_custom_call.1} parent=0
    #allocation2 [shape = 'u8[4096]{0}', space=vmem, size = 0x1000, scoped, tag = 'input window, operand 0, single buffered']
    #allocation3 [shape = 's32[1]{0}', space=sflag, size = 0x4, scoped, tag = 'scoped memory for tpu_custom_call.1']
    #allocation4 [shape = 's32[1]{0}', space=sflag, size = 0x4, scoped, tag = 'scoped memory for tpu_custom_call.1']
    #allocation5 [shape = 'u8[4096]{0}', space=vmem, size = 0x1000, scoped, tag = 'input window, operand 1, single buffered']
    #allocation6 [shape = 's32[1]{0}', space=sflag, size = 0x4, scoped, tag = 'scoped memory for tpu_custom_call.1']
    #allocation7 [shape = 'u8[65536]{0}', space=vmem, size = 0x10000, scoped, tag = 'input window, operand 2, single buffered']
    #allocation8 [shape = 'u8[65536]{0}', space=vmem, size = 0x10000, scoped, tag = 'input window, operand 3, single buffered']
    #allocation9 [shape = 's32[1]{0}', space=sflag, size = 0x4, scoped, tag = 'scoped memory for tpu_custom_call.1']
    #allocation10 [shape = 'u8[65536]{0}', space=vmem, size = 0x10000, scoped, tag = 'input window, operand 5, single buffered']
    #allocation11 [shape = 'u8[65536]{0}', space=vmem, size = 0x10000, scoped, tag = 'input window, operand 7, single buffered']
    #allocation12 [shape = 's32[1]{0}', space=sflag, size = 0x4, scoped, tag = 'scoped memory for tpu_custom_call.1']
    #allocation13 [shape = 'u8[4096]{0}', space=vmem, size = 0x1000, scoped, tag = 'output window, operand 0, single buffered']
    %14 = vsyncpa [#allocation3], 0
    %15 = vsyncpa [#allocation6], 0
    %16 = vsyncpa [#allocation9], 0
    %17 = vsyncpa [#allocation12], 0
    %18 = vsyncpa [#allocation4], 0
    // Predicated region
    $region2: #{tpu_custom_call.1} parent=1 // pred_check
      _
    $region3: #{tpu_custom_call.1} parent=1 // pred_check_branch
      %20 = sbr.rel (0) target = $region5
    $region4: #{tpu_custom_call.1} parent=1 // pred_region
      %s22 = ssub.s32 128, 128
      %23 = vsyncadd [#allocation3], %s22
      %s25 = sshll.u32 [#allocation2], 4
      %s26 = int_to_ptr.vmem [resolvable:$true] %s25
      %28 = dma.hbm_to_vmem [thread:$0]  %s0, 128, %s26, [#allocation3]
    $region5: #{tpu_custom_call.1} parent=1 // pred_fallthru
      _
    // Predicated region
    $region6: #{tpu_custom_call.1} parent=1 // pred_check
      _
    $region7: #{tpu_custom_call.1} parent=1 // pred_check_branch
      %30 = sbr.rel (0) target = $region9
    $region8: #{tpu_custom_call.1} parent=1 // pred_region
      %s32 = ssub.s32 128, 128
      %33 = vsyncadd [#allocation6], %s32
      %s35 = sshll.u32 [#allocation5], 4
      %s36 = int_to_ptr.vmem [resolvable:$true] %s35
      %38 = dma.hbm_to_vmem [thread:$0]  %s1, 128, %s36, [#allocation6]
    $region9: #{tpu_custom_call.1} parent=1 // pred_fallthru
      _
    // Predicated region
    $region10: #{tpu_custom_call.1} parent=1 // pred_check
      _
    $region11: #{tpu_custom_call.1} parent=1 // pred_check_branch
      %40 = sbr.rel (0) target = $region13
    $region12: #{tpu_custom_call.1} parent=1 // pred_region
      %s42 = ssub.s32 2048, 2048
      %43 = vsyncadd [#allocation6], %s42
      %s44 = sshll.u32 [#allocation7], 4
      %s45 = int_to_ptr.vmem [resolvable:$true] %s44
      %50 = dma.hbm_to_vmem [thread:$0]  %s2, 2048, %s45, [#allocation6], 128, 128, 8
    $region13: #{tpu_custom_call.1} parent=1 // pred_fallthru
      _
    // Predicated region
    $region14: #{tpu_custom_call.1} parent=1 // pred_check
      _
    $region15: #{tpu_custom_call.1} parent=1 // pred_check_branch
      %52 = sbr.rel (0) target = $region17
    $region16: #{tpu_custom_call.1} parent=1 // pred_region
      %s54 = ssub.s32 2048, 2048
      %55 = vsyncadd [#allocation9], %s54
      %s56 = sshll.u32 [#allocation8], 4
      %s57 = int_to_ptr.vmem [resolvable:$true] %s56
      %62 = dma.hbm_to_vmem [thread:$0]  %s3, 2048, %s57, [#allocation9], 128, 128, 8
    $region17: #{tpu_custom_call.1} parent=1 // pred_fallthru
      _
    // Predicated region
    $region18: #{tpu_custom_call.1} parent=1 // pred_check
      _
    $region19: #{tpu_custom_call.1} parent=1 // pred_check_branch
      %64 = sbr.rel (0) target = $region21
    $region20: #{tpu_custom_call.1} parent=1 // pred_region
      _
    $region21: #{tpu_custom_call.1} parent=1 // pred_fallthru
      _
    // Predicated region
    $region22: #{tpu_custom_call.1} parent=1 // pred_check
      _
    $region23: #{tpu_custom_call.1} parent=1 // pred_check_branch
      %66 = sbr.rel (0) target = $region25
    $region24: #{tpu_custom_call.1} parent=1 // pred_region
      %s68 = ssub.s32 2048, 2048
      %69 = vsyncadd [#allocation9], %s68
      %s70 = sshll.u32 [#allocation10], 4
      %s71 = int_to_ptr.vmem [resolvable:$true] %s70
      %76 = dma.hbm_to_vmem [thread:$0]  %s5, 2048, %s71, [#allocation9], 128, 128, 8
    $region25: #{tpu_custom_call.1} parent=1 // pred_fallthru
      _
    // Predicated region
    $region26: #{tpu_custom_call.1} parent=1 // pred_check
      _
    $region27: #{tpu_custom_call.1} parent=1 // pred_check_branch
      %78 = sbr.rel (0) target = $region29
    $region28: #{tpu_custom_call.1} parent=1 // pred_region
      _
    $region29: #{tpu_custom_call.1} parent=1 // pred_fallthru
      _
    // Predicated region
    $region30: #{tpu_custom_call.1} parent=1 // pred_check
      _
    $region31: #{tpu_custom_call.1} parent=1 // pred_check_branch
      %80 = sbr.rel (0) target = $region33
    $region32: #{tpu_custom_call.1} parent=1 // pred_region
      %s82 = ssub.s32 2048, 2048
      %83 = vsyncadd [#allocation12], %s82
      %s84 = sshll.u32 [#allocation11], 4
      %s85 = int_to_ptr.vmem [resolvable:$true] %s84
      %90 = dma.hbm_to_vmem [thread:$0]  %s7, 2048, %s85, [#allocation12], 128, 128, 8
    $region33: #{tpu_custom_call.1} parent=1 // pred_fallthru
      _
    // Predicated region
    $region34: #{tpu_custom_call.1} parent=1 // pred_check
      _
    $region35: #{tpu_custom_call.1} parent=1 // pred_check_branch
      %92 = sbr.rel (0) target = $region37
    $region36: #{tpu_custom_call.1} parent=1 // pred_region
      _
    $region37: #{tpu_custom_call.1} parent=1 // pred_fallthru
      _
    // Predicated region
    $region38: #{tpu_custom_call.1} parent=1 // pred_check
      _
    $region39: #{tpu_custom_call.1} parent=1 // pred_check_branch
      %94 = sbr.rel (0) target = $region41
    $region40: #{tpu_custom_call.1} parent=1 // pred_region
      %95 = dma.done [#allocation3], 128
    $region41: #{tpu_custom_call.1} parent=1 // pred_fallthru
      _
    // Predicated region
    $region42: #{tpu_custom_call.1} parent=1 // pred_check
      _
    $region43: #{tpu_custom_call.1} parent=1 // pred_check_branch
      %97 = sbr.rel (0) target = $region45
    $region44: #{tpu_custom_call.1} parent=1 // pred_region
      %98 = dma.done [#allocation6], 128
    $region45: #{tpu_custom_call.1} parent=1 // pred_fallthru
      _
    // Predicated region
    $region46: #{tpu_custom_call.1} parent=1 // pred_check
      _
    $region47: #{tpu_custom_call.1} parent=1 // pred_check_branch
      %100 = sbr.rel (0) target = $region49
    $region48: #{tpu_custom_call.1} parent=1 // pred_region
      %101 = dma.done [#allocation6], 2048
    $region49: #{tpu_custom_call.1} parent=1 // pred_fallthru
      _
    // Predicated region
    $region50: #{tpu_custom_call.1} parent=1 // pred_check
      _
    $region51: #{tpu_custom_call.1} parent=1 // pred_check_branch
      %103 = sbr.rel (0) target = $region53
    $region52: #{tpu_custom_call.1} parent=1 // pred_region
      %104 = dma.done [#allocation9], 2048
    $region53: #{tpu_custom_call.1} parent=1 // pred_fallthru
      _
    // Predicated region
    $region54: #{tpu_custom_call.1} parent=1 // pred_check
      _
    $region55: #{tpu_custom_call.1} parent=1 // pred_check_branch
      %106 = sbr.rel (0) target = $region57
    $region56: #{tpu_custom_call.1} parent=1 // pred_region
      %107 = dma.done [#allocation9], 2048
    $region57: #{tpu_custom_call.1} parent=1 // pred_fallthru
      _
    // Predicated region
    $region58: #{tpu_custom_call.1} parent=1 // pred_check
      _
    $region59: #{tpu_custom_call.1} parent=1 // pred_check_branch
      %109 = sbr.rel (0) target = $region61
    $region60: #{tpu_custom_call.1} parent=1 // pred_region
      %110 = dma.done [#allocation12], 2048
    $region61: #{tpu_custom_call.1} parent=1 // pred_fallthru
      _
    %v111 = vld [vmem:[#allocation2] sm:$0xff]
    %v112 = vld [vmem:[#allocation7] sm:$0xff]
    %v113 = vld [vmem:[#allocation7 + $0x8] sm:$0xff]
    %v114 = vld [vmem:[#allocation7 + $0x10] sm:$0xff]
    %v115 = vld [vmem:[#allocation7 + $0x18] sm:$0xff]
    %v116 = vld [vmem:[#allocation7 + $0x20] sm:$0xff]
    %v117 = vld [vmem:[#allocation7 + $0x28] sm:$0xff]
    %v118 = vld [vmem:[#allocation7 + $0x30] sm:$0xff]
    %v119 = vld [vmem:[#allocation7 + $0x38] sm:$0xff]
    %v120 = vld [vmem:[#allocation7 + $0x40] sm:$0xff]
    %v121 = vld [vmem:[#allocation7 + $0x48] sm:$0xff]
    %v122 = vld [vmem:[#allocation7 + $0x50] sm:$0xff]
    %v123 = vld [vmem:[#allocation7 + $0x58] sm:$0xff]
    %v124 = vld [vmem:[#allocation7 + $0x60] sm:$0xff]
    %v125 = vld [vmem:[#allocation7 + $0x68] sm:$0xff]
    %v126 = vld [vmem:[#allocation7 + $0x70] sm:$0xff]
    %v127 = vld [vmem:[#allocation7 + $0x78] sm:$0xff]
    %v128 = vld [vmem:[#allocation5] sm:$0xff]
    %v129 = vld [vmem:[#allocation8] sm:$0xff]
    %v130 = vld [vmem:[#allocation8 + $0x8] sm:$0xff]
    %v131 = vld [vmem:[#allocation8 + $0x10] sm:$0xff]
    %v132 = vld [vmem:[#allocation8 + $0x18] sm:$0xff]
    %v133 = vld [vmem:[#allocation8 + $0x20] sm:$0xff]
    %v134 = vld [vmem:[#allocation8 + $0x28] sm:$0xff]
    %v135 = vld [vmem:[#allocation8 + $0x30] sm:$0xff]
    %v136 = vld [vmem:[#allocation8 + $0x38] sm:$0xff]
    %v137 = vld [vmem:[#allocation8 + $0x40] sm:$0xff]
    %v138 = vld [vmem:[#allocation8 + $0x48] sm:$0xff]
    %v139 = vld [vmem:[#allocation8 + $0x50] sm:$0xff]
    %v140 = vld [vmem:[#allocation8 + $0x58] sm:$0xff]
    %v141 = vld [vmem:[#allocation8 + $0x60] sm:$0xff]
    %v142 = vld [vmem:[#allocation8 + $0x68] sm:$0xff]
    %v143 = vld [vmem:[#allocation8 + $0x70] sm:$0xff]
    %v144 = vld [vmem:[#allocation8 + $0x78] sm:$0xff]
    %145 = vmatprep.subr.mxu0 0.0
    %146 = vmatpush1.msra.mxu0 %v129
    %147 = vmatprep.subr.mxu0 0.0
    %148 = vmatpush1.msra.mxu0 %v130
    %149 = vmatprep.subr.mxu0 0.0
    %150 = vmatpush1.msra.mxu0 %v131
    %151 = vmatprep.subr.mxu0 0.0
    %152 = vmatpush1.msra.mxu0 %v132
    %153 = vmatprep.subr.mxu0 0.0
    %154 = vmatpush1.msra.mxu0 %v133
    %155 = vmatprep.subr.mxu0 0.0
    %156 = vmatpush1.msra.mxu0 %v134
    %157 = vmatprep.subr.mxu0 0.0
    %158 = vmatpush1.msra.mxu0 %v135
    %159 = vmatprep.subr.mxu0 0.0
    %160 = vmatpush1.msra.mxu0 %v136
    %161 = vmatprep.subr.mxu0 0.0
    %162 = vmatpush1.msra.mxu0 %v137
    %163 = vmatprep.subr.mxu0 0.0
    %164 = vmatpush1.msra.mxu0 %v138
    %165 = vmatprep.subr.mxu0 0.0
    %166 = vmatpush1.msra.mxu0 %v139
    %167 = vmatprep.subr.mxu0 0.0
    %168 = vmatpush1.msra.mxu0 %v140
    %169 = vmatprep.subr.mxu0 0.0
    %170 = vmatpush1.msra.mxu0 %v141
    %171 = vmatprep.subr.mxu0 0.0
    %172 = vmatpush1.msra.mxu0 %v142
    %173 = vmatprep.subr.mxu0 0.0
    %174 = vmatpush1.msra.mxu0 %v143
    %175 = vmatprep.subr.mxu0 0.0
    %176 = vmatpush1.msra.mxu0 %v144
    %177 = vmatprep.subr.mxu0 0.0
    %178 = vmatpush1.msra.mxu0 0.0
    %179 = vmatprep.subr.mxu0 0.0
    %180 = vmatpush1.msra.mxu0 0.0
    %181 = vmatprep.subr.mxu0 0.0
    %182 = vmatpush1.msra.mxu0 0.0
    %183 = vmatprep.subr.mxu0 0.0
    %184 = vmatpush1.msra.mxu0 0.0
    %185 = vmatprep.subr.mxu0 0.0
    %186 = vmatpush1.msra.mxu0 0.0
    %187 = vmatprep.subr.mxu0 0.0
    %188 = vmatpush1.msra.mxu0 0.0
    %189 = vmatprep.subr.mxu0 0.0
    %190 = vmatpush1.msra.mxu0 0.0
    %191 = vmatprep.subr.mxu0 0.0
    %192 = vmatpush1.msra.mxu0 0.0
    %193 = vmatprep.subr.mxu0 0.0
    %194 = vmatpush1.msra.mxu0 0.0
    %195 = vmatprep.subr.mxu0 0.0
    %196 = vmatpush1.msra.mxu0 0.0
    %197 = vmatprep.subr.mxu0 0.0
    %198 = vmatpush1.msra.mxu0 0.0
    %199 = vmatprep.subr.mxu0 0.0
    %200 = vmatpush1.msra.mxu0 0.0
    %201 = vmatprep.subr.mxu0 0.0
    %202 = vmatpush1.msra.mxu0 0.0
    %203 = vmatprep.subr.mxu0 0.0
    %204 = vmatpush1.msra.mxu0 0.0
    %205 = vmatprep.subr.mxu0 0.0
    %206 = vmatpush1.msra.mxu0 0.0
    %207 = vmatprep.subr.mxu0 0.0
    %208 = vmatpush1.msra.mxu0 0.0
    %209 = vmatprep.mubr.f32.mxu0 0.0
    %210 = vmatmul.mubr.f32.gmra.mrb[0].mxu0 %v128
    %v211 = vpop.f32.mrb[0].mxu0
    %v212 = vadd.f32 0.0, %v211
    %v213 = vpop.f32.mrb[0].mxu0
    %214 = vdwg.mxu0
    %215 = vmatprep.subr.mxu0 0.0
    %216 = vmatpush1.msra.mxu0 %v112
    %217 = vmatprep.subr.mxu0 0.0
    %218 = vmatpush1.msra.mxu0 %v113
    %219 = vmatprep.subr.mxu0 0.0
    %220 = vmatpush1.msra.mxu0 %v114
    %221 = vmatprep.subr.mxu0 0.0
    %222 = vmatpush1.msra.mxu0 %v115
    %223 = vmatprep.subr.mxu0 0.0
    %224 = vmatpush1.msra.mxu0 %v116
    %225 = vmatprep.subr.mxu0 0.0
    %226 = vmatpush1.msra.mxu0 %v117
    %227 = vmatprep.subr.mxu0 0.0
    %228 = vmatpush1.msra.mxu0 %v118
    %229 = vmatprep.subr.mxu0 0.0
    %230 = vmatpush1.msra.mxu0 %v119
    %231 = vmatprep.subr.mxu0 0.0
    %232 = vmatpush1.msra.mxu0 %v120
    %233 = vmatprep.subr.mxu0 0.0
    %234 = vmatpush1.msra.mxu0 %v121
    %235 = vmatprep.subr.mxu0 0.0
    %236 = vmatpush1.msra.mxu0 %v122
    %237 = vmatprep.subr.mxu0 0.0
    %238 = vmatpush1.msra.mxu0 %v123
    %239 = vmatprep.subr.mxu0 0.0
    %240 = vmatpush1.msra.mxu0 %v124
    %241 = vmatprep.subr.mxu0 0.0
    %242 = vmatpush1.msra.mxu0 %v125
    %243 = vmatprep.subr.mxu0 0.0
    %244 = vmatpush1.msra.mxu0 %v126
    %245 = vmatprep.subr.mxu0 0.0
    %246 = vmatpush1.msra.mxu0 %v127
    %247 = vmatprep.subr.mxu0 0.0
    %248 = vmatpush1.msra.mxu0 0.0
    %249 = vmatprep.subr.mxu0 0.0
    %250 = vmatpush1.msra.mxu0 0.0
    %251 = vmatprep.subr.mxu0 0.0
    %252 = vmatpush1.msra.mxu0 0.0
    %253 = vmatprep.subr.mxu0 0.0
    %254 = vmatpush1.msra.mxu0 0.0
    %255 = vmatprep.subr.mxu0 0.0
    %256 = vmatpush1.msra.mxu0 0.0
    %257 = vmatprep.subr.mxu0 0.0
    %258 = vmatpush1.msra.mxu0 0.0
    %259 = vmatprep.subr.mxu0 0.0
    %260 = vmatpush1.msra.mxu0 0.0
    %261 = vmatprep.subr.mxu0 0.0
    %262 = vmatpush1.msra.mxu0 0.0
    %263 = vmatprep.subr.mxu0 0.0
    %264 = vmatpush1.msra.mxu0 0.0
    %265 = vmatprep.subr.mxu0 0.0
    %266 = vmatpush1.msra.mxu0 0.0
    %267 = vmatprep.subr.mxu0 0.0
    %268 = vmatpush1.msra.mxu0 0.0
    %269 = vmatprep.subr.mxu0 0.0
    %270 = vmatpush1.msra.mxu0 0.0
    %271 = vmatprep.subr.mxu0 0.0
    %272 = vmatpush1.msra.mxu0 0.0
    %273 = vmatprep.subr.mxu0 0.0
    %274 = vmatpush1.msra.mxu0 0.0
    %275 = vmatprep.subr.mxu0 0.0
    %276 = vmatpush1.msra.mxu0 0.0
    %277 = vmatprep.subr.mxu0 0.0
    %278 = vmatpush1.msra.mxu0 0.0
    %279 = vmatprep.mubr.f32.mxu0 0.0
    %280 = vmatmul.mubr.f32.gmra.mrb[0].mxu0 %v111
    %v281 = vpop.f32.mrb[0].mxu0
    %v282 = vadd.f32 %v212, %v281
    %v283 = vpop.f32.mrb[0].mxu0
    %284 = vdwg.mxu0
    %v285 = vld [vmem:[%s4] sm:$0x1]
    %v287 = vlaneseq
    %v288 = vshrl.u32 %v287, 7
    %v289 = vsub.s32 0, %v288
    %v290 = vrot.slane %v285, %v289
    %v292 = vadd.f32 %v282, %v290
    %v293 = vmax.f32 %v292, 0.0
    %v294 = vld [vmem:[#allocation10] sm:$0xff]
    %v295 = vld [vmem:[#allocation10 + $0x8] sm:$0xff]
    %v296 = vld [vmem:[#allocation10 + $0x10] sm:$0xff]
    %v297 = vld [vmem:[#allocation10 + $0x18] sm:$0xff]
    %v298 = vld [vmem:[#allocation10 + $0x20] sm:$0xff]
    %v299 = vld [vmem:[#allocation10 + $0x28] sm:$0xff]
    %v300 = vld [vmem:[#allocation10 + $0x30] sm:$0xff]
    %v301 = vld [vmem:[#allocation10 + $0x38] sm:$0xff]
    %v302 = vld [vmem:[#allocation10 + $0x40] sm:$0xff]
    %v303 = vld [vmem:[#allocation10 + $0x48] sm:$0xff]
    %v304 = vld [vmem:[#allocation10 + $0x50] sm:$0xff]
    %v305 = vld [vmem:[#allocation10 + $0x58] sm:$0xff]
    %v306 = vld [vmem:[#allocation10 + $0x60] sm:$0xff]
    %v307 = vld [vmem:[#allocation10 + $0x68] sm:$0xff]
    %v308 = vld [vmem:[#allocation10 + $0x70] sm:$0xff]
    %v309 = vld [vmem:[#allocation10 + $0x78] sm:$0xff]
    %v310 = vld [vmem:[%s6] sm:$0x1]
    %v312 = vlaneseq
    %v313 = vshrl.u32 %v312, 7
    %v314 = vsub.s32 0, %v313
    %v315 = vrot.slane %v310, %v314
    %317 = vmatprep.subr.mxu0 0.0
    %318 = vmatpush1.msra.mxu0 %v294
    %319 = vmatprep.subr.mxu0 0.0
    %320 = vmatpush1.msra.mxu0 %v295
    %321 = vmatprep.subr.mxu0 0.0
    %322 = vmatpush1.msra.mxu0 %v296
    %323 = vmatprep.subr.mxu0 0.0
    %324 = vmatpush1.msra.mxu0 %v297
    %325 = vmatprep.subr.mxu0 0.0
    %326 = vmatpush1.msra.mxu0 %v298
    %327 = vmatprep.subr.mxu0 0.0
    %328 = vmatpush1.msra.mxu0 %v299
    %329 = vmatprep.subr.mxu0 0.0
    %330 = vmatpush1.msra.mxu0 %v300
    %331 = vmatprep.subr.mxu0 0.0
    %332 = vmatpush1.msra.mxu0 %v301
    %333 = vmatprep.subr.mxu0 0.0
    %334 = vmatpush1.msra.mxu0 %v302
    %335 = vmatprep.subr.mxu0 0.0
    %336 = vmatpush1.msra.mxu0 %v303
    %337 = vmatprep.subr.mxu0 0.0
    %338 = vmatpush1.msra.mxu0 %v304
    %339 = vmatprep.subr.mxu0 0.0
    %340 = vmatpush1.msra.mxu0 %v305
    %341 = vmatprep.subr.mxu0 0.0
    %342 = vmatpush1.msra.mxu0 %v306
    %343 = vmatprep.subr.mxu0 0.0
    %344 = vmatpush1.msra.mxu0 %v307
    %345 = vmatprep.subr.mxu0 0.0
    %346 = vmatpush1.msra.mxu0 %v308
    %347 = vmatprep.subr.mxu0 0.0
    %348 = vmatpush1.msra.mxu0 %v309
    %349 = vmatprep.subr.mxu0 0.0
    %350 = vmatpush1.msra.mxu0 0.0
    %351 = vmatprep.subr.mxu0 0.0
    %352 = vmatpush1.msra.mxu0 0.0
    %353 = vmatprep.subr.mxu0 0.0
    %354 = vmatpush1.msra.mxu0 0.0
    %355 = vmatprep.subr.mxu0 0.0
    %356 = vmatpush1.msra.mxu0 0.0
    %357 = vmatprep.subr.mxu0 0.0
    %358 = vmatpush1.msra.mxu0 0.0
    %359 = vmatprep.subr.mxu0 0.0
    %360 = vmatpush1.msra.mxu0 0.0
    %361 = vmatprep.subr.mxu0 0.0
    %362 = vmatpush1.msra.mxu0 0.0
    %363 = vmatprep.subr.mxu0 0.0
    %364 = vmatpush1.msra.mxu0 0.0
    %365 = vmatprep.subr.mxu0 0.0
    %366 = vmatpush1.msra.mxu0 0.0
    %367 = vmatprep.subr.mxu0 0.0
    %368 = vmatpush1.msra.mxu0 0.0
    %369 = vmatprep.subr.mxu0 0.0
    %370 = vmatpush1.msra.mxu0 0.0
    %371 = vmatprep.subr.mxu0 0.0
    %372 = vmatpush1.msra.mxu0 0.0
    %373 = vmatprep.subr.mxu0 0.0
    %374 = vmatpush1.msra.mxu0 0.0
    %375 = vmatprep.subr.mxu0 0.0
    %376 = vmatpush1.msra.mxu0 0.0
    %377 = vmatprep.subr.mxu0 0.0
    %378 = vmatpush1.msra.mxu0 0.0
    %379 = vmatprep.subr.mxu0 0.0
    %380 = vmatpush1.msra.mxu0 0.0
    %381 = vmatprep.mubr.f32.mxu0 0.0
    %382 = vmatmul.mubr.f32.gmra.mrb[0].mxu0 %v293
    %v383 = vpop.f32.mrb[0].mxu0
    %v384 = vadd.f32 %v315, %v383
    %v385 = vpop.f32.mrb[0].mxu0
    %386 = vdwg.mxu0
    %v387 = vmax.f32 %v384, 0.0
    %v388 = vld [vmem:[#allocation11] sm:$0xff]
    %v389 = vld [vmem:[#allocation11 + $0x8] sm:$0xff]
    %v390 = vld [vmem:[#allocation11 + $0x10] sm:$0xff]
    %v391 = vld [vmem:[#allocation11 + $0x18] sm:$0xff]
    %v392 = vld [vmem:[#allocation11 + $0x20] sm:$0xff]
    %v393 = vld [vmem:[#allocation11 + $0x28] sm:$0xff]
    %v394 = vld [vmem:[#allocation11 + $0x30] sm:$0xff]
    %v395 = vld [vmem:[#allocation11 + $0x38] sm:$0xff]
    %v396 = vld [vmem:[#allocation11 + $0x40] sm:$0xff]
    %v397 = vld [vmem:[#allocation11 + $0x48] sm:$0xff]
    %v398 = vld [vmem:[#allocation11 + $0x50] sm:$0xff]
    %v399 = vld [vmem:[#allocation11 + $0x58] sm:$0xff]
    %v400 = vld [vmem:[#allocation11 + $0x60] sm:$0xff]
    %v401 = vld [vmem:[#allocation11 + $0x68] sm:$0xff]
    %v402 = vld [vmem:[#allocation11 + $0x70] sm:$0xff]
    %v403 = vld [vmem:[#allocation11 + $0x78] sm:$0xff]
    %v404 = vld [vmem:[%s8] sm:$0x1]
    %v406 = vlaneseq
    %v407 = vshrl.u32 %v406, 7
    %v408 = vsub.s32 0, %v407
    %v409 = vrot.slane %v404, %v408
    %411 = vmatprep.subr.mxu0 0.0
    %412 = vmatpush1.msra.mxu0 %v388
    %413 = vmatprep.subr.mxu0 0.0
    %414 = vmatpush1.msra.mxu0 %v389
    %415 = vmatprep.subr.mxu0 0.0
    %416 = vmatpush1.msra.mxu0 %v390
    %417 = vmatprep.subr.mxu0 0.0
    %418 = vmatpush1.msra.mxu0 %v391
    %419 = vmatprep.subr.mxu0 0.0
    %420 = vmatpush1.msra.mxu0 %v392
    %421 = vmatprep.subr.mxu0 0.0
    %422 = vmatpush1.msra.mxu0 %v393
    %423 = vmatprep.subr.mxu0 0.0
    %424 = vmatpush1.msra.mxu0 %v394
    %425 = vmatprep.subr.mxu0 0.0
    %426 = vmatpush1.msra.mxu0 %v395
    %427 = vmatprep.subr.mxu0 0.0
    %428 = vmatpush1.msra.mxu0 %v396
    %429 = vmatprep.subr.mxu0 0.0
    %430 = vmatpush1.msra.mxu0 %v397
    %431 = vmatprep.subr.mxu0 0.0
    %432 = vmatpush1.msra.mxu0 %v398
    %433 = vmatprep.subr.mxu0 0.0
    %434 = vmatpush1.msra.mxu0 %v399
    %435 = vmatprep.subr.mxu0 0.0
    %436 = vmatpush1.msra.mxu0 %v400
    %437 = vmatprep.subr.mxu0 0.0
    %438 = vmatpush1.msra.mxu0 %v401
    %439 = vmatprep.subr.mxu0 0.0
    %440 = vmatpush1.msra.mxu0 %v402
    %441 = vmatprep.subr.mxu0 0.0
    %442 = vmatpush1.msra.mxu0 %v403
    %443 = vmatprep.subr.mxu0 0.0
    %444 = vmatpush1.msra.mxu0 0.0
    %445 = vmatprep.subr.mxu0 0.0
    %446 = vmatpush1.msra.mxu0 0.0
    %447 = vmatprep.subr.mxu0 0.0
    %448 = vmatpush1.msra.mxu0 0.0
    %449 = vmatprep.subr.mxu0 0.0
    %450 = vmatpush1.msra.mxu0 0.0
    %451 = vmatprep.subr.mxu0 0.0
    %452 = vmatpush1.msra.mxu0 0.0
    %453 = vmatprep.subr.mxu0 0.0
    %454 = vmatpush1.msra.mxu0 0.0
    %455 = vmatprep.subr.mxu0 0.0
    %456 = vmatpush1.msra.mxu0 0.0
    %457 = vmatprep.subr.mxu0 0.0
    %458 = vmatpush1.msra.mxu0 0.0
    %459 = vmatprep.subr.mxu0 0.0
    %460 = vmatpush1.msra.mxu0 0.0
    %461 = vmatprep.subr.mxu0 0.0
    %462 = vmatpush1.msra.mxu0 0.0
    %463 = vmatprep.subr.mxu0 0.0
    %464 = vmatpush1.msra.mxu0 0.0
    %465 = vmatprep.subr.mxu0 0.0
    %466 = vmatpush1.msra.mxu0 0.0
    %467 = vmatprep.subr.mxu0 0.0
    %468 = vmatpush1.msra.mxu0 0.0
    %469 = vmatprep.subr.mxu0 0.0
    %470 = vmatpush1.msra.mxu0 0.0
    %471 = vmatprep.subr.mxu0 0.0
    %472 = vmatpush1.msra.mxu0 0.0
    %473 = vmatprep.subr.mxu0 0.0
    %474 = vmatpush1.msra.mxu0 0.0
    %475 = vmatprep.mubr.f32.mxu0 0.0
    %476 = vmatmul.mubr.f32.gmra.mrb[0].mxu0 %v387
    %v477 = vpop.f32.mrb[0].mxu0
    %v478 = vadd.f32 %v409, %v477
    %v479 = vpop.f32.mrb[0].mxu0
    %480 = vdwg.mxu0
    %481 = vst [vmem:[#allocation13] sm:$0xff] %v478
    // Predicated region
    $region62: #{tpu_custom_call.1} parent=1 // pred_check
      _
    $region63: #{tpu_custom_call.1} parent=1 // pred_check_branch
      %483 = sbr.rel (0) target = $region65
    $region64: #{tpu_custom_call.1} parent=1 // pred_region
      %s485 = ssub.s32 128, 128
      %486 = vsyncadd [#allocation4], %s485
      %s488 = sshll.u32 [#allocation13], 4
      %s489 = int_to_ptr.vmem [resolvable:$true] %s488
      %491 = dma.vmem_to_hbm [thread:$0]  %s489, 128, %s9, [#allocation4]
    $region65: #{tpu_custom_call.1} parent=1 // pred_fallthru
      _
    // Predicated region
    $region66: #{tpu_custom_call.1} parent=1 // pred_check
      _
    $region67: #{tpu_custom_call.1} parent=1 // pred_check_branch
      %493 = sbr.rel (0) target = $region69
    $region68: #{tpu_custom_call.1} parent=1 // pred_region
      %494 = dma.done [#allocation4], 128
    $region69: #{tpu_custom_call.1} parent=1 // pred_fallthru
      _
    %495 = vsyncpa [#allocation3], 1
    %496 = vsyncpa [#allocation6], 1
    %497 = vsyncpa [#allocation9], 1
    %498 = vsyncpa [#allocation12], 1
    %499 = vsyncpa [#allocation4], 1

// kernel: tpu_custom_call.1
$region0: #{tpu_custom_call.1}
  #allocation0 [shape = 'u32[]', space=smem, size = 0x4, offset = 0x4, fixed_abs, tag = 'smem constant byte address 0x4 - core index']
  #allocation1 [shape = 'u32[144,128]{1,0:T(1,128)}', space=vmem, size = 0x12000, scoped, tag = 'internal scratch']
  %s0 = inlined_call_operand.hbm [shape: f32[8,128], index: 0, kind: input, shape index: {}]
  %s1 = inlined_call_operand.hbm [shape: f32[8,128], index: 1, kind: input, shape index: {}]
  %s2 = inlined_call_operand.hbm [shape: f32[128,128], index: 2, kind: input, shape index: {}]
  %s3 = inlined_call_operand.hbm [shape: f32[128,128], index: 3, kind: input, shape index: {}]
  %s4 = inlined_call_operand.vmem [shape: f32[1,128], index: 4, kind: input, shape index: {}]
  %s5 = inlined_call_operand.hbm [shape: f32[128,128], index: 5, kind: input, shape index: {}]
  %s6 = inlined_call_operand.vmem [shape: f32[1,128], index: 6, kind: input, shape index: {}]
  %s7 = inlined_call_operand.hbm [shape: f32[128,128], index: 7, kind: input, shape index: {}]
  %s8 = inlined_call_operand.vmem [shape: f32[1,128], index: 8, kind: input, shape index: {}]
  %s9 = inlined_call_operand.hbm [shape: f32[8,128], index: 9, kind: output, shape index: {}]
  %s10 = sld [smem:[#allocation0]]
  $region70: #{tpu_custom_call.1} parent=0
    _
  %s12 = ssub.s32 1, %s10
  %s13 = scalar_select 0, %s12, %s10
  $region1: #{tpu_custom_call.1} parent=0
    #allocation2 [shape = 'u8[4096]{0}', space=vmem, size = 0x1000, scoped, tag = 'input window, operand 0, single buffered']
    #allocation3 [shape = 's32[1]{0}', space=sflag, size = 0x4, scoped, tag = 'scoped memory for tpu_custom_call.1']
    #allocation4 [shape = 's32[1]{0}', space=sflag, size = 0x4, scoped, tag = 'scoped memory for tpu_custom_call.1']
    #allocation5 [shape = 'u8[4096]{0}', space=vmem, size = 0x1000, scoped, tag = 'input window, operand 1, single buffered']
    #allocation6 [shape = 's32[1]{0}', space=sflag, size = 0x4, scoped, tag = 'scoped memory for tpu_custom_call.1']
    #allocation7 [shape = 'u8[65536]{0}', space=vmem, size = 0x10000, scoped, tag = 'input window, operand 2, single buffered']
    #allocation8 [shape = 'u8[65536]{0}', space=vmem, size = 0x10000, scoped, tag = 'input window, operand 3, single buffered']
    #allocation9 [shape = 's32[1]{0}', space=sflag, size = 0x4, scoped, tag = 'scoped memory for tpu_custom_call.1']
    #allocation10 [shape = 'u8[65536]{0}', space=vmem, size = 0x10000, scoped, tag = 'input window, operand 5, single buffered']
    #allocation11 [shape = 'u8[65536]{0}', space=vmem, size = 0x10000, scoped, tag = 'input window, operand 7, single buffered']
    #allocation12 [shape = 's32[1]{0}', space=sflag, size = 0x4, scoped, tag = 'scoped memory for tpu_custom_call.1']
    #allocation13 [shape = 'u8[4096]{0}', space=vmem, size = 0x1000, scoped, tag = 'output window, operand 0, single buffered']
    %14 = vsyncpa [#allocation3], 0
    %15 = vsyncpa [#allocation6], 0
    %16 = vsyncpa [#allocation9], 0
    %17 = vsyncpa [#allocation12], 0
    %18 = vsyncpa [#allocation4], 0
    // Predicated region
    $region2: #{tpu_custom_call.1} parent=1 // pred_check
      _
    $region3: #{tpu_custom_call.1} parent=1 // pred_check_branch
      %20 = sbr.rel (0) target = $region5
    $region4: #{tpu_custom_call.1} parent=1 // pred_region
      %s22 = ssub.s32 128, 128
      %23 = vsyncadd [#allocation3], %s22
      %s25 = sshll.u32 [#allocation2], 4
      %s26 = int_to_ptr.vmem [resolvable:$true] %s25
      %28 = dma.hbm_to_vmem [thread:$0]  %s0, 128, %s26, [#allocation3]
    $region5: #{tpu_custom_call.1} parent=1 // pred_fallthru
      _
    // Predicated region
    $region6: #{tpu_custom_call.1} parent=1 // pred_check
      _
    $region7: #{tpu_custom_call.1} parent=1 // pred_check_branch
      %30 = sbr.rel (0) target = $region9
    $region8: #{tpu_custom_call.1} parent=1 // pred_region
      %s32 = ssub.s32 128, 128
      %33 = vsyncadd [#allocation6], %s32
      %s35 = sshll.u32 [#allocation5], 4
      %s36 = int_to_ptr.vmem [resolvable:$true] %s35
      %38 = dma.hbm_to_vmem [thread:$0]  %s1, 128, %s36, [#allocation6]
    $region9: #{tpu_custom_call.1} parent=1 // pred_fallthru
      _
    // Predicated region
    $region10: #{tpu_custom_call.1} parent=1 // pred_check
      _
    $region11: #{tpu_custom_call.1} parent=1 // pred_check_branch
      %40 = sbr.rel (0) target = $region13
    $region12: #{tpu_custom_call.1} parent=1 // pred_region
      %s42 = ssub.s32 2048, 2048
      %43 = vsyncadd [#allocation6], %s42
      %s44 = sshll.u32 [#allocation7], 4
      %s45 = int_to_ptr.vmem [resolvable:$true] %s44
      %50 = dma.hbm_to_vmem [thread:$0]  %s2, 2048, %s45, [#allocation6], 128, 128, 8
    $region13: #{tpu_custom_call.1} parent=1 // pred_fallthru
      _
    // Predicated region
    $region14: #{tpu_custom_call.1} parent=1 // pred_check
      _
    $region15: #{tpu_custom_call.1} parent=1 // pred_check_branch
      %52 = sbr.rel (0) target = $region17
    $region16: #{tpu_custom_call.1} parent=1 // pred_region
      %s54 = ssub.s32 2048, 2048
      %55 = vsyncadd [#allocation9], %s54
      %s56 = sshll.u32 [#allocation8], 4
      %s57 = int_to_ptr.vmem [resolvable:$true] %s56
      %62 = dma.hbm_to_vmem [thread:$0]  %s3, 2048, %s57, [#allocation9], 128, 128, 8
    $region17: #{tpu_custom_call.1} parent=1 // pred_fallthru
      _
    // Predicated region
    $region18: #{tpu_custom_call.1} parent=1 // pred_check
      _
    $region19: #{tpu_custom_call.1} parent=1 // pred_check_branch
      %64 = sbr.rel (0) target = $region21
    $region20: #{tpu_custom_call.1} parent=1 // pred_region
      _
    $region21: #{tpu_custom_call.1} parent=1 // pred_fallthru
      _
    // Predicated region
    $region22: #{tpu_custom_call.1} parent=1 // pred_check
      _
    $region23: #{tpu_custom_call.1} parent=1 // pred_check_branch
      %66 = sbr.rel (0) target = $region25
    $region24: #{tpu_custom_call.1} parent=1 // pred_region
      %s68 = ssub.s32 2048, 2048
      %69 = vsyncadd [#allocation9], %s68
      %s70 = sshll.u32 [#allocation10], 4
      %s71 = int_to_ptr.vmem [resolvable:$true] %s70
      %76 = dma.hbm_to_vmem [thread:$0]  %s5, 2048, %s71, [#allocation9], 128, 128, 8
    $region25: #{tpu_custom_call.1} parent=1 // pred_fallthru
      _
    // Predicated region
    $region26: #{tpu_custom_call.1} parent=1 // pred_check
      _
    $region27: #{tpu_custom_call.1} parent=1 // pred_check_branch
      %78 = sbr.rel (0) target = $region29
    $region28: #{tpu_custom_call.1} parent=1 // pred_region
      _
    $region29: #{tpu_custom_call.1} parent=1 // pred_fallthru
      _
    // Predicated region
    $region30: #{tpu_custom_call.1} parent=1 // pred_check
      _
    $region31: #{tpu_custom_call.1} parent=1 // pred_check_branch
      %80 = sbr.rel (0) target = $region33
    $region32: #{tpu_custom_call.1} parent=1 // pred_region
      %s82 = ssub.s32 2048, 2048
      %83 = vsyncadd [#allocation12], %s82
      %s84 = sshll.u32 [#allocation11], 4
      %s85 = int_to_ptr.vmem [resolvable:$true] %s84
      %90 = dma.hbm_to_vmem [thread:$0]  %s7, 2048, %s85, [#allocation12], 128, 128, 8
    $region33: #{tpu_custom_call.1} parent=1 // pred_fallthru
      _
    // Predicated region
    $region34: #{tpu_custom_call.1} parent=1 // pred_check
      _
    $region35: #{tpu_custom_call.1} parent=1 // pred_check_branch
      %92 = sbr.rel (0) target = $region37
    $region36: #{tpu_custom_call.1} parent=1 // pred_region
      _
    $region37: #{tpu_custom_call.1} parent=1 // pred_fallthru
      _
    // Predicated region
    $region38: #{tpu_custom_call.1} parent=1 // pred_check
      _
    $region39: #{tpu_custom_call.1} parent=1 // pred_check_branch
      %94 = sbr.rel (0) target = $region41
    $region40: #{tpu_custom_call.1} parent=1 // pred_region
      %95 = dma.done [#allocation3], 128
    $region41: #{tpu_custom_call.1} parent=1 // pred_fallthru
      _
    // Predicated region
    $region42: #{tpu_custom_call.1} parent=1 // pred_check
      _
    $region43: #{tpu_custom_call.1} parent=1 // pred_check_branch
      %97 = sbr.rel (0) target = $region45
    $region44: #{tpu_custom_call.1} parent=1 // pred_region
      %98 = dma.done [#allocation6], 128
    $region45: #{tpu_custom_call.1} parent=1 // pred_fallthru
      _
    // Predicated region
    $region46: #{tpu_custom_call.1} parent=1 // pred_check
      _
    $region47: #{tpu_custom_call.1} parent=1 // pred_check_branch
      %100 = sbr.rel (0) target = $region49
    $region48: #{tpu_custom_call.1} parent=1 // pred_region
      %101 = dma.done [#allocation6], 2048
    $region49: #{tpu_custom_call.1} parent=1 // pred_fallthru
      _
    // Predicated region
    $region50: #{tpu_custom_call.1} parent=1 // pred_check
      _
    $region51: #{tpu_custom_call.1} parent=1 // pred_check_branch
      %103 = sbr.rel (0) target = $region53
    $region52: #{tpu_custom_call.1} parent=1 // pred_region
      %104 = dma.done [#allocation9], 2048
    $region53: #{tpu_custom_call.1} parent=1 // pred_fallthru
      _
    // Predicated region
    $region54: #{tpu_custom_call.1} parent=1 // pred_check
      _
    $region55: #{tpu_custom_call.1} parent=1 // pred_check_branch
      %106 = sbr.rel (0) target = $region57
    $region56: #{tpu_custom_call.1} parent=1 // pred_region
      %107 = dma.done [#allocation9], 2048
    $region57: #{tpu_custom_call.1} parent=1 // pred_fallthru
      _
    // Predicated region
    $region58: #{tpu_custom_call.1} parent=1 // pred_check
      _
    $region59: #{tpu_custom_call.1} parent=1 // pred_check_branch
      %109 = sbr.rel (0) target = $region61
    $region60: #{tpu_custom_call.1} parent=1 // pred_region
      %110 = dma.done [#allocation12], 2048
    $region61: #{tpu_custom_call.1} parent=1 // pred_fallthru
      _
    %v111 = vld [vmem:[#allocation2] sm:$0xff]
    %v112 = vld [vmem:[#allocation7] sm:$0xff]
    %v113 = vld [vmem:[#allocation7 + $0x8] sm:$0xff]
    %v114 = vld [vmem:[#allocation7 + $0x10] sm:$0xff]
    %v115 = vld [vmem:[#allocation7 + $0x18] sm:$0xff]
    %v116 = vld [vmem:[#allocation7 + $0x20] sm:$0xff]
    %v117 = vld [vmem:[#allocation7 + $0x28] sm:$0xff]
    %v118 = vld [vmem:[#allocation7 + $0x30] sm:$0xff]
    %v119 = vld [vmem:[#allocation7 + $0x38] sm:$0xff]
    %v120 = vld [vmem:[#allocation7 + $0x40] sm:$0xff]
    %v121 = vld [vmem:[#allocation7 + $0x48] sm:$0xff]
    %v122 = vld [vmem:[#allocation7 + $0x50] sm:$0xff]
    %v123 = vld [vmem:[#allocation7 + $0x58] sm:$0xff]
    %v124 = vld [vmem:[#allocation7 + $0x60] sm:$0xff]
    %v125 = vld [vmem:[#allocation7 + $0x68] sm:$0xff]
    %v126 = vld [vmem:[#allocation7 + $0x70] sm:$0xff]
    %v127 = vld [vmem:[#allocation7 + $0x78] sm:$0xff]
    %v128 = vld [vmem:[#allocation5] sm:$0xff]
    %v129 = vld [vmem:[#allocation8] sm:$0xff]
    %v130 = vld [vmem:[#allocation8 + $0x8] sm:$0xff]
    %v131 = vld [vmem:[#allocation8 + $0x10] sm:$0xff]
    %v132 = vld [vmem:[#allocation8 + $0x18] sm:$0xff]
    %v133 = vld [vmem:[#allocation8 + $0x20] sm:$0xff]
    %v134 = vld [vmem:[#allocation8 + $0x28] sm:$0xff]
    %v135 = vld [vmem:[#allocation8 + $0x30] sm:$0xff]
    %v136 = vld [vmem:[#allocation8 + $0x38] sm:$0xff]
    %v137 = vld [vmem:[#allocation8 + $0x40] sm:$0xff]
    %v138 = vld [vmem:[#allocation8 + $0x48] sm:$0xff]
    %v139 = vld [vmem:[#allocation8 + $0x50] sm:$0xff]
    %v140 = vld [vmem:[#allocation8 + $0x58] sm:$0xff]
    %v141 = vld [vmem:[#allocation8 + $0x60] sm:$0xff]
    %v142 = vld [vmem:[#allocation8 + $0x68] sm:$0xff]
    %v143 = vld [vmem:[#allocation8 + $0x70] sm:$0xff]
    %v144 = vld [vmem:[#allocation8 + $0x78] sm:$0xff]
    %145 = vmatprep.subr.mxu0 0.0
    %146 = vmatpush1.msra.mxu0 %v129
    %147 = vmatprep.subr.mxu0 0.0
    %148 = vmatpush1.msra.mxu0 %v130
    %149 = vmatprep.subr.mxu0 0.0
    %150 = vmatpush1.msra.mxu0 %v131
    %151 = vmatprep.subr.mxu0 0.0
    %152 = vmatpush1.msra.mxu0 %v132
    %153 = vmatprep.subr.mxu0 0.0
    %154 = vmatpush1.msra.mxu0 %v133
    %155 = vmatprep.subr.mxu0 0.0
    %156 = vmatpush1.msra.mxu0 %v134
    %157 = vmatprep.subr.mxu0 0.0
    %158 = vmatpush1.msra.mxu0 %v135
    %159 = vmatprep.subr.mxu0 0.0
    %160 = vmatpush1.msra.mxu0 %v136
    %161 = vmatprep.subr.mxu0 0.0
    %162 = vmatpush1.msra.mxu0 %v137
    %163 = vmatprep.subr.mxu0 0.0
    %164 = vmatpush1.msra.mxu0 %v138
    %165 = vmatprep.subr.mxu0 0.0
    %166 = vmatpush1.msra.mxu0 %v139
    %167 = vmatprep.subr.mxu0 0.0
    %168 = vmatpush1.msra.mxu0 %v140
    %169 = vmatprep.subr.mxu0 0.0
    %170 = vmatpush1.msra.mxu0 %v141
    %171 = vmatprep.subr.mxu0 0.0
    %172 = vmatpush1.msra.mxu0 %v142
    %173 = vmatprep.subr.mxu0 0.0
    %174 = vmatpush1.msra.mxu0 %v143
    %175 = vmatprep.subr.mxu0 0.0
    %176 = vmatpush1.msra.mxu0 %v144
    %177 = vmatprep.subr.mxu0 0.0
    %178 = vmatpush1.msra.mxu0 0.0
    %179 = vmatprep.subr.mxu0 0.0
    %180 = vmatpush1.msra.mxu0 0.0
    %181 = vmatprep.subr.mxu0 0.0
    %182 = vmatpush1.msra.mxu0 0.0
    %183 = vmatprep.subr.mxu0 0.0
    %184 = vmatpush1.msra.mxu0 0.0
    %185 = vmatprep.subr.mxu0 0.0
    %186 = vmatpush1.msra.mxu0 0.0
    %187 = vmatprep.subr.mxu0 0.0
    %188 = vmatpush1.msra.mxu0 0.0
    %189 = vmatprep.subr.mxu0 0.0
    %190 = vmatpush1.msra.mxu0 0.0
    %191 = vmatprep.subr.mxu0 0.0
    %192 = vmatpush1.msra.mxu0 0.0
    %193 = vmatprep.subr.mxu0 0.0
    %194 = vmatpush1.msra.mxu0 0.0
    %195 = vmatprep.subr.mxu0 0.0
    %196 = vmatpush1.msra.mxu0 0.0
    %197 = vmatprep.subr.mxu0 0.0
    %198 = vmatpush1.msra.mxu0 0.0
    %199 = vmatprep.subr.mxu0 0.0
    %200 = vmatpush1.msra.mxu0 0.0
    %201 = vmatprep.subr.mxu0 0.0
    %202 = vmatpush1.msra.mxu0 0.0
    %203 = vmatprep.subr.mxu0 0.0
    %204 = vmatpush1.msra.mxu0 0.0
    %205 = vmatprep.subr.mxu0 0.0
    %206 = vmatpush1.msra.mxu0 0.0
    %207 = vmatprep.subr.mxu0 0.0
    %208 = vmatpush1.msra.mxu0 0.0
    %209 = vmatprep.mubr.f32.mxu0 0.0
    %210 = vmatmul.mubr.f32.gmra.mrb[0].mxu0 %v128
    %v211 = vpop.f32.mrb[0].mxu0
    %v212 = vadd.f32 0.0, %v211
    %v213 = vpop.f32.mrb[0].mxu0
    %214 = vdwg.mxu0
    %215 = vmatprep.subr.mxu0 0.0
    %216 = vmatpush1.msra.mxu0 %v112
    %217 = vmatprep.subr.mxu0 0.0
    %218 = vmatpush1.msra.mxu0 %v113
    %219 = vmatprep.subr.mxu0 0.0
    %220 = vmatpush1.msra.mxu0 %v114
    %221 = vmatprep.subr.mxu0 0.0
    %222 = vmatpush1.msra.mxu0 %v115
    %223 = vmatprep.subr.mxu0 0.0
    %224 = vmatpush1.msra.mxu0 %v116
    %225 = vmatprep.subr.mxu0 0.0
    %226 = vmatpush1.msra.mxu0 %v117
    %227 = vmatprep.subr.mxu0 0.0
    %228 = vmatpush1.msra.mxu0 %v118
    %229 = vmatprep.subr.mxu0 0.0
    %230 = vmatpush1.msra.mxu0 %v119
    %231 = vmatprep.subr.mxu0 0.0
    %232 = vmatpush1.msra.mxu0 %v120
    %233 = vmatprep.subr.mxu0 0.0
    %234 = vmatpush1.msra.mxu0 %v121
    %235 = vmatprep.subr.mxu0 0.0
    %236 = vmatpush1.msra.mxu0 %v122
    %237 = vmatprep.subr.mxu0 0.0
    %238 = vmatpush1.msra.mxu0 %v123
    %239 = vmatprep.subr.mxu0 0.0
    %240 = vmatpush1.msra.mxu0 %v124
    %241 = vmatprep.subr.mxu0 0.0
    %242 = vmatpush1.msra.mxu0 %v125
    %243 = vmatprep.subr.mxu0 0.0
    %244 = vmatpush1.msra.mxu0 %v126
    %245 = vmatprep.subr.mxu0 0.0
    %246 = vmatpush1.msra.mxu0 %v127
    %247 = vmatprep.subr.mxu0 0.0
    %248 = vmatpush1.msra.mxu0 0.0
    %249 = vmatprep.subr.mxu0 0.0
    %250 = vmatpush1.msra.mxu0 0.0
    %251 = vmatprep.subr.mxu0 0.0
    %252 = vmatpush1.msra.mxu0 0.0
    %253 = vmatprep.subr.mxu0 0.0
    %254 = vmatpush1.msra.mxu0 0.0
    %255 = vmatprep.subr.mxu0 0.0
    %256 = vmatpush1.msra.mxu0 0.0
    %257 = vmatprep.subr.mxu0 0.0
    %258 = vmatpush1.msra.mxu0 0.0
    %259 = vmatprep.subr.mxu0 0.0
    %260 = vmatpush1.msra.mxu0 0.0
    %261 = vmatprep.subr.mxu0 0.0
    %262 = vmatpush1.msra.mxu0 0.0
    %263 = vmatprep.subr.mxu0 0.0
    %264 = vmatpush1.msra.mxu0 0.0
    %265 = vmatprep.subr.mxu0 0.0
    %266 = vmatpush1.msra.mxu0 0.0
    %267 = vmatprep.subr.mxu0 0.0
    %268 = vmatpush1.msra.mxu0 0.0
    %269 = vmatprep.subr.mxu0 0.0
    %270 = vmatpush1.msra.mxu0 0.0
    %271 = vmatprep.subr.mxu0 0.0
    %272 = vmatpush1.msra.mxu0 0.0
    %273 = vmatprep.subr.mxu0 0.0
    %274 = vmatpush1.msra.mxu0 0.0
    %275 = vmatprep.subr.mxu0 0.0
    %276 = vmatpush1.msra.mxu0 0.0
    %277 = vmatprep.subr.mxu0 0.0
    %278 = vmatpush1.msra.mxu0 0.0
    %279 = vmatprep.mubr.f32.mxu0 0.0
    %280 = vmatmul.mubr.f32.gmra.mrb[0].mxu0 %v111
    %v281 = vpop.f32.mrb[0].mxu0
    %v282 = vadd.f32 %v212, %v281
    %v283 = vpop.f32.mrb[0].mxu0
    %284 = vdwg.mxu0
    %v285 = vld [vmem:[%s4] sm:$0x1]
    %v287 = vlaneseq
    %v288 = vshrl.u32 %v287, 7
    %v289 = vsub.s32 0, %v288
    %v290 = vrot.slane %v285, %v289
    %v292 = vadd.f32 %v282, %v290
    %v293 = vmax.f32 %v292, 0.0
    %v294 = vld [vmem:[#allocation10] sm:$0xff]
    %v295 = vld [vmem:[#allocation10 + $0x8] sm:$0xff]
    %v296 = vld [vmem:[#allocation10 + $0x10] sm:$0xff]
    %v297 = vld [vmem:[#allocation10 + $0x18] sm:$0xff]
    %v298 = vld [vmem:[#allocation10 + $0x20] sm:$0xff]
    %v299 = vld [vmem:[#allocation10 + $0x28] sm:$0xff]
    %v300 = vld [vmem:[#allocation10 + $0x30] sm:$0xff]
    %v301 = vld [vmem:[#allocation10 + $0x38] sm:$0xff]
    %v302 = vld [vmem:[#allocation10 + $0x40] sm:$0xff]
    %v303 = vld [vmem:[#allocation10 + $0x48] sm:$0xff]
    %v304 = vld [vmem:[#allocation10 + $0x50] sm:$0xff]
    %v305 = vld [vmem:[#allocation10 + $0x58] sm:$0xff]
    %v306 = vld [vmem:[#allocation10 + $0x60] sm:$0xff]
    %v307 = vld [vmem:[#allocation10 + $0x68] sm:$0xff]
    %v308 = vld [vmem:[#allocation10 + $0x70] sm:$0xff]
    %v309 = vld [vmem:[#allocation10 + $0x78] sm:$0xff]
    %v310 = vld [vmem:[%s6] sm:$0x1]
    %v312 = vlaneseq
    %v313 = vshrl.u32 %v312, 7
    %v314 = vsub.s32 0, %v313
    %v315 = vrot.slane %v310, %v314
    %317 = vmatprep.subr.mxu0 0.0
    %318 = vmatpush1.msra.mxu0 %v294
    %319 = vmatprep.subr.mxu0 0.0
    %320 = vmatpush1.msra.mxu0 %v295
    %321 = vmatprep.subr.mxu0 0.0
    %322 = vmatpush1.msra.mxu0 %v296
    %323 = vmatprep.subr.mxu0 0.0
    %324 = vmatpush1.msra.mxu0 %v297
    %325 = vmatprep.subr.mxu0 0.0
    %326 = vmatpush1.msra.mxu0 %v298
    %327 = vmatprep.subr.mxu0 0.0
    %328 = vmatpush1.msra.mxu0 %v299
    %329 = vmatprep.subr.mxu0 0.0
    %330 = vmatpush1.msra.mxu0 %v300
    %331 = vmatprep.subr.mxu0 0.0
    %332 = vmatpush1.msra.mxu0 %v301
    %333 = vmatprep.subr.mxu0 0.0
    %334 = vmatpush1.msra.mxu0 %v302
    %335 = vmatprep.subr.mxu0 0.0
    %336 = vmatpush1.msra.mxu0 %v303
    %337 = vmatprep.subr.mxu0 0.0
    %338 = vmatpush1.msra.mxu0 %v304
    %339 = vmatprep.subr.mxu0 0.0
    %340 = vmatpush1.msra.mxu0 %v305
    %341 = vmatprep.subr.mxu0 0.0
    %342 = vmatpush1.msra.mxu0 %v306
    %343 = vmatprep.subr.mxu0 0.0
    %344 = vmatpush1.msra.mxu0 %v307
    %345 = vmatprep.subr.mxu0 0.0
    %346 = vmatpush1.msra.mxu0 %v308
    %347 = vmatprep.subr.mxu0 0.0
    %348 = vmatpush1.msra.mxu0 %v309
    %349 = vmatprep.subr.mxu0 0.0
    %350 = vmatpush1.msra.mxu0 0.0
    %351 = vmatprep.subr.mxu0 0.0
    %352 = vmatpush1.msra.mxu0 0.0
    %353 = vmatprep.subr.mxu0 0.0
    %354 = vmatpush1.msra.mxu0 0.0
    %355 = vmatprep.subr.mxu0 0.0
    %356 = vmatpush1.msra.mxu0 0.0
    %357 = vmatprep.subr.mxu0 0.0
    %358 = vmatpush1.msra.mxu0 0.0
    %359 = vmatprep.subr.mxu0 0.0
    %360 = vmatpush1.msra.mxu0 0.0
    %361 = vmatprep.subr.mxu0 0.0
    %362 = vmatpush1.msra.mxu0 0.0
    %363 = vmatprep.subr.mxu0 0.0
    %364 = vmatpush1.msra.mxu0 0.0
    %365 = vmatprep.subr.mxu0 0.0
    %366 = vmatpush1.msra.mxu0 0.0
    %367 = vmatprep.subr.mxu0 0.0
    %368 = vmatpush1.msra.mxu0 0.0
    %369 = vmatprep.subr.mxu0 0.0
    %370 = vmatpush1.msra.mxu0 0.0
    %371 = vmatprep.subr.mxu0 0.0
    %372 = vmatpush1.msra.mxu0 0.0
    %373 = vmatprep.subr.mxu0 0.0
    %374 = vmatpush1.msra.mxu0 0.0
    %375 = vmatprep.subr.mxu0 0.0
    %376 = vmatpush1.msra.mxu0 0.0
    %377 = vmatprep.subr.mxu0 0.0
    %378 = vmatpush1.msra.mxu0 0.0
    %379 = vmatprep.subr.mxu0 0.0
    %380 = vmatpush1.msra.mxu0 0.0
    %381 = vmatprep.mubr.f32.mxu0 0.0
    %382 = vmatmul.mubr.f32.gmra.mrb[0].mxu0 %v293
    %v383 = vpop.f32.mrb[0].mxu0
    %v384 = vadd.f32 %v315, %v383
    %v385 = vpop.f32.mrb[0].mxu0
    %386 = vdwg.mxu0
    %v387 = vmax.f32 %v384, 0.0
    %v388 = vld [vmem:[#allocation11] sm:$0xff]
    %v389 = vld [vmem:[#allocation11 + $0x8] sm:$0xff]
    %v390 = vld [vmem:[#allocation11 + $0x10] sm:$0xff]
    %v391 = vld [vmem:[#allocation11 + $0x18] sm:$0xff]
    %v392 = vld [vmem:[#allocation11 + $0x20] sm:$0xff]
    %v393 = vld [vmem:[#allocation11 + $0x28] sm:$0xff]
    %v394 = vld [vmem:[#allocation11 + $0x30] sm:$0xff]
    %v395 = vld [vmem:[#allocation11 + $0x38] sm:$0xff]
    %v396 = vld [vmem:[#allocation11 + $0x40] sm:$0xff]
    %v397 = vld [vmem:[#allocation11 + $0x48] sm:$0xff]
    %v398 = vld [vmem:[#allocation11 + $0x50] sm:$0xff]
    %v399 = vld [vmem:[#allocation11 + $0x58] sm:$0xff]
    %v400 = vld [vmem:[#allocation11 + $0x60] sm:$0xff]
    %v401 = vld [vmem:[#allocation11 + $0x68] sm:$0xff]
    %v402 = vld [vmem:[#allocation11 + $0x70] sm:$0xff]
    %v403 = vld [vmem:[#allocation11 + $0x78] sm:$0xff]
    %v404 = vld [vmem:[%s8] sm:$0x1]
    %v406 = vlaneseq
    %v407 = vshrl.u32 %v406, 7
    %v408 = vsub.s32 0, %v407
    %v409 = vrot.slane %v404, %v408
    %411 = vmatprep.subr.mxu0 0.0
    %412 = vmatpush1.msra.mxu0 %v388
    %413 = vmatprep.subr.mxu0 0.0
    %414 = vmatpush1.msra.mxu0 %v389
    %415 = vmatprep.subr.mxu0 0.0
    %416 = vmatpush1.msra.mxu0 %v390
    %417 = vmatprep.subr.mxu0 0.0
    %418 = vmatpush1.msra.mxu0 %v391
    %419 = vmatprep.subr.mxu0 0.0
    %420 = vmatpush1.msra.mxu0 %v392
    %421 = vmatprep.subr.mxu0 0.0
    %422 = vmatpush1.msra.mxu0 %v393
    %423 = vmatprep.subr.mxu0 0.0
    %424 = vmatpush1.msra.mxu0 %v394
    %425 = vmatprep.subr.mxu0 0.0
    %426 = vmatpush1.msra.mxu0 %v395
    %427 = vmatprep.subr.mxu0 0.0
    %428 = vmatpush1.msra.mxu0 %v396
    %429 = vmatprep.subr.mxu0 0.0
    %430 = vmatpush1.msra.mxu0 %v397
    %431 = vmatprep.subr.mxu0 0.0
    %432 = vmatpush1.msra.mxu0 %v398
    %433 = vmatprep.subr.mxu0 0.0
    %434 = vmatpush1.msra.mxu0 %v399
    %435 = vmatprep.subr.mxu0 0.0
    %436 = vmatpush1.msra.mxu0 %v400
    %437 = vmatprep.subr.mxu0 0.0
    %438 = vmatpush1.msra.mxu0 %v401
    %439 = vmatprep.subr.mxu0 0.0
    %440 = vmatpush1.msra.mxu0 %v402
    %441 = vmatprep.subr.mxu0 0.0
    %442 = vmatpush1.msra.mxu0 %v403
    %443 = vmatprep.subr.mxu0 0.0
    %444 = vmatpush1.msra.mxu0 0.0
    %445 = vmatprep.subr.mxu0 0.0
    %446 = vmatpush1.msra.mxu0 0.0
    %447 = vmatprep.subr.mxu0 0.0
    %448 = vmatpush1.msra.mxu0 0.0
    %449 = vmatprep.subr.mxu0 0.0
    %450 = vmatpush1.msra.mxu0 0.0
    %451 = vmatprep.subr.mxu0 0.0
    %452 = vmatpush1.msra.mxu0 0.0
    %453 = vmatprep.subr.mxu0 0.0
    %454 = vmatpush1.msra.mxu0 0.0
    %455 = vmatprep.subr.mxu0 0.0
    %456 = vmatpush1.msra.mxu0 0.0
    %457 = vmatprep.subr.mxu0 0.0
    %458 = vmatpush1.msra.mxu0 0.0
    %459 = vmatprep.subr.mxu0 0.0
    %460 = vmatpush1.msra.mxu0 0.0
    %461 = vmatprep.subr.mxu0 0.0
    %462 = vmatpush1.msra.mxu0 0.0
    %463 = vmatprep.subr.mxu0 0.0
    %464 = vmatpush1.msra.mxu0 0.0
    %465 = vmatprep.subr.mxu0 0.0
    %466 = vmatpush1.msra.mxu0 0.0
    %467 = vmatprep.subr.mxu0 0.0
    %468 = vmatpush1.msra.mxu0 0.0
    %469 = vmatprep.subr.mxu0 0.0
    %470 = vmatpush1.msra.mxu0 0.0
    %471 = vmatprep.subr.mxu0 0.0
    %472 = vmatpush1.msra.mxu0 0.0
    %473 = vmatprep.subr.mxu0 0.0
    %474 = vmatpush1.msra.mxu0 0.0
    %475 = vmatprep.mubr.f32.mxu0 0.0
    %476 = vmatmul.mubr.f32.gmra.mrb[0].mxu0 %v387
    %v477 = vpop.f32.mrb[0].mxu0
    %v478 = vadd.f32 %v409, %v477
    %v479 = vpop.f32.mrb[0].mxu0
    %480 = vdwg.mxu0
    %481 = vst [vmem:[#allocation13] sm:$0xff] %v478
    // Predicated region
    $region62: #{tpu_custom_call.1} parent=1 // pred_check
      _
    $region63: #{tpu_custom_call.1} parent=1 // pred_check_branch
      %483 = sbr.rel (0) target = $region65
    $region64: #{tpu_custom_call.1} parent=1 // pred_region
      %s485 = ssub.s32 128, 128
      %486 = vsyncadd [#allocation4], %s485
      %s488 = sshll.u32 [#allocation13], 4
      %s489 = int_to_ptr.vmem [resolvable:$true] %s488
      %491 = dma.vmem_to_hbm [thread:$0]  %s489, 128, %s9, [#allocation4]
    $region65: #{tpu_custom_call.1} parent=1 // pred_fallthru
      _
    // Predicated region
    $region66: #{tpu_custom_call.1} parent=1 // pred_check
      _
    $region67: #{tpu_custom_call.1} parent=1 // pred_check_branch
      %493 = sbr.rel (0) target = $region69
    $region68: #{tpu_custom_call.1} parent=1 // pred_region
      %494 = dma.done [#allocation4], 128
    $region69: #{tpu_custom_call.1} parent=1 // pred_fallthru
      _
    %495 = vsyncpa [#allocation3], 1
    %496 = vsyncpa [#allocation6], 1
    %497 = vsyncpa [#allocation9], 1
    %498 = vsyncpa [#allocation12], 1
    %499 = vsyncpa [#allocation4], 1

</llo_original>
